<compile_context>
chip_gen: v5e
topology: v5e:2x2
jax: 0.10.0
libtpu: 0.0.40
codegen_flags: <defaults>
</compile_context>

<pallas_src>
import math
import functools

import jax
import jax.numpy as jnp
from jax.experimental import pallas as pl
from jax.experimental.pallas import tpu as pltpu


def _layernorm(x, gamma, beta, eps=1e-5):
    # x: (S, E); gamma/beta: (1, E). PyTorch LayerNorm: biased variance, f32 math.
    mu = jnp.mean(x, axis=-1, keepdims=True)
    var = jnp.mean((x - mu) * (x - mu), axis=-1, keepdims=True)
    inv = jax.lax.rsqrt(var + eps)
    return (x - mu) * inv * gamma + beta


def _tb_kernel(heads, head_dim,
               v_ref, k_ref, q_ref,
               wv_ref, wk_ref, wq_ref, wfc_ref, bfc_ref,
               g1_ref, be1_ref, g2_ref, be2_ref,
               w1_ref, b1_ref, w2_ref, b2_ref,
               o_ref):
    # Per-grid-step block: one batch element, full (seq, embed) tile.
    q = q_ref[0]          # (S, E) f32
    k = k_ref[0]
    v = v_ref[0]
    S, E = q.shape
    H, D = heads, head_dim
    scale = 1.0 / math.sqrt(E)   # PyTorch: softmax(energy / embed_size**0.5)

    bf = jnp.bfloat16

    # ---- SelfAttention: fused block-diagonal head projections (lane-dense) -----
    q_p = jnp.dot(q.astype(bf), wq_ref[...], preferred_element_type=jnp.float32)  # (S,E)
    k_p = jnp.dot(k.astype(bf), wk_ref[...], preferred_element_type=jnp.float32)
    v_p = jnp.dot(v.astype(bf), wv_ref[...], preferred_element_type=jnp.float32)

    # (S, E) -> (H, S, D) batched view; per-head energy/attention as batched einsums.
    qh = jnp.transpose(q_p.reshape(S, H, D), (1, 0, 2)).astype(bf)
    kh = jnp.transpose(k_p.reshape(S, H, D), (1, 0, 2)).astype(bf)
    vh = jnp.transpose(v_p.reshape(S, H, D), (1, 0, 2)).astype(bf)

    energy = jnp.einsum('hqd,hkd->hqk', qh, kh,
                        preferred_element_type=jnp.float32) * scale       # (H,S,S) f32
    energy = energy - jnp.max(energy, axis=-1, keepdims=True)
    p = jnp.exp(energy)
    # EUP reciprocal instead of a VALU divide.
    attn = p * pl.reciprocal(jnp.sum(p, axis=-1, keepdims=True), approx=True)

    ctx = jnp.einsum('hqk,hkd->hqd', attn.astype(bf), vh,
                     preferred_element_type=jnp.float32)                  # (H,S,D) f32
    att = jnp.transpose(ctx, (1, 0, 2)).reshape(S, E)                     # (S, E)

    att = jnp.dot(att.astype(bf), wfc_ref[...],
                  preferred_element_type=jnp.float32) + bfc_ref[...]

    # ---- residual + LayerNorm 1 (dropout = identity at eval), f32 --------------
    x = _layernorm(att + q, g1_ref[...], be1_ref[...])

    # ---- feed forward: Linear -> Tanh -> Linear --------------------------------
    h1 = jnp.tanh(jnp.dot(x.astype(bf), w1_ref[...],
                          preferred_element_type=jnp.float32) + b1_ref[...])
    ff = jnp.dot(h1.astype(bf), w2_ref[...],
                 preferred_element_type=jnp.float32) + b2_ref[...]

    # ---- residual + LayerNorm 2 -------------------------------------------------
    o_ref[0] = _layernorm(ff + x, g2_ref[...], be2_ref[...]).astype(o_ref.dtype)


def transformer_block(value, key, query, params, *, heads):
    N, S, E = query.shape
    D = E // heads
    H_FF = params["w1"].shape[0]

    bf = jnp.bfloat16
    eye = jnp.eye(heads, dtype=jnp.float32)
    # Block-diag replicates the shared per-head Linear across heads:
    #   (x @ kron(I, W.T))[:, h*D:(h+1)*D] == x[:, h*D:(h+1)*D] @ W.T  for every head.
    wq_bd = jnp.kron(eye, params["wq"].T).astype(bf)     # (E, E)
    wk_bd = jnp.kron(eye, params["wk"].T).astype(bf)
    wv_bd = jnp.kron(eye, params["wv"].T).astype(bf)
    wfc_t = params["wfc"].T.astype(bf)                   # (E, E)    (in, out)
    w1_t = params["w1"].T.astype(bf)                     # (E, H_FF) (in, out)
    w2_t = params["w2"].T.astype(bf)                     # (H_FF, E) (in, out)

    full = lambda shape: pl.BlockSpec(shape, lambda n: (0,) * len(shape))
    seq_spec = pl.BlockSpec((1, S, E), lambda n: (n, 0, 0))

    kernel = functools.partial(_tb_kernel, heads, D)

    # NOTE: for production-size E / S / H_FF, additionally single-buffer the constant
    # weight blocks (pipeline_mode=pl.Buffered(1)) and tile attention (online softmax)
    # and the FF hidden dim; at these shapes everything fits one step comfortably.
    return pl.pallas_call(
        kernel,
        out_shape=jax.ShapeDtypeStruct((N, S, E), query.dtype),
        grid_spec=pltpu.PrefetchScalarGridSpec(
            num_scalar_prefetch=0,
            grid=(N,),
            in_specs=[
                seq_spec, seq_spec, seq_spec,               # value, key, query
                full((E, E)), full((E, E)), full((E, E)),   # Wv_bd, Wk_bd, Wq_bd
                full((E, E)), full((1, E)),                 # Wfc^T, bfc
                full((1, E)), full((1, E)),                 # ln1 gamma, beta
                full((1, E)), full((1, E)),                 # ln2 gamma, beta
                full((E, H_FF)), full((1, H_FF)),           # W1^T, b1
                full((H_FF, E)), full((1, E)),              # W2^T, b2
            ],
            out_specs=seq_spec,
        ),
        compiler_params=pltpu.CompilerParams(
            dimension_semantics=("parallel",),
            vmem_limit_bytes=48 * 1024 * 1024,
        ),
    )(value, key, query,
      wv_bd, wk_bd, wq_bd, wfc_t, params["bfc"],
      params["g1"], params["be1"], params["g2"], params["be2"],
      w1_t, params["b1"], w2_t, params["b2"])


def init_params(rng, embed_size, heads, forward_expansion):
    D = embed_size // heads
    H_FF = forward_expansion * embed_size
    keys = jax.random.split(rng, 8)
    s = 0.1
    return {
        # PyTorch nn.Linear convention: (out_features, in_features)
        "wv": jax.random.normal(keys[0], (D, D), jnp.float32) * s,
        "wk": jax.random.normal(keys[1], (D, D), jnp.float32) * s,
        "wq": jax.random.normal(keys[2], (D, D), jnp.float32) * s,
        "wfc": jax.random.normal(keys[3], (embed_size, embed_size), jnp.float32) * s,
        "bfc": jax.random.normal(keys[4], (1, embed_size), jnp.float32) * s,
        "g1": jnp.ones((1, embed_size), jnp.float32),
        "be1": jnp.zeros((1, embed_size), jnp.float32),
        "g2": jnp.ones((1, embed_size), jnp.float32),
        "be2": jnp.zeros((1, embed_size), jnp.float32),
        "w1": jax.random.normal(keys[5], (H_FF, embed_size), jnp.float32) * s,
        "b1": jax.random.normal(keys[6], (1, H_FF), jnp.float32) * s,
        "w2": jax.random.normal(keys[7], (embed_size, H_FF), jnp.float32) * s,
        "b2": jnp.zeros((1, embed_size), jnp.float32),
    }


if __name__ == "__main__":
    N, S, E = 2, 8, 32
    HEADS = 4
    FWD_EXP = 4

    root = jax.random.PRNGKey(0)
    k_v, k_k, k_q, k_p = jax.random.split(root, 4)

    value = jax.random.normal(k_v, (N, S, E), jnp.float32)
    key = jax.random.normal(k_k, (N, S, E), jnp.float32)
    query = jax.random.normal(k_q, (N, S, E), jnp.float32)

    params = init_params(k_p, E, HEADS, FWD_EXP)

    out = transformer_block(value, key, query, params, heads=HEADS)
    jax.block_until_ready(out)
    assert out.shape == (N, S, E)
    print("KERNEL_OK")
</pallas_src>

<mosaic_0001>
module attributes {stable_mosaic.version = 11 : i64} {
  func.func @_tb_kernel(%arg0: i32, %arg1: memref<1x8x32xf32, #tpu.memory_space<vmem>>, %arg2: memref<1x8x32xf32, #tpu.memory_space<vmem>>, %arg3: memref<1x8x32xf32, #tpu.memory_space<vmem>>, %arg4: memref<32x32xbf16, #tpu.memory_space<vmem>>, %arg5: memref<32x32xbf16, #tpu.memory_space<vmem>>, %arg6: memref<32x32xbf16, #tpu.memory_space<vmem>>, %arg7: memref<32x32xbf16, #tpu.memory_space<vmem>>, %arg8: memref<1x32xf32, #tpu.memory_space<vmem>>, %arg9: memref<1x32xf32, #tpu.memory_space<vmem>>, %arg10: memref<1x32xf32, #tpu.memory_space<vmem>>, %arg11: memref<1x32xf32, #tpu.memory_space<vmem>>, %arg12: memref<1x32xf32, #tpu.memory_space<vmem>>, %arg13: memref<32x128xbf16, #tpu.memory_space<vmem>>, %arg14: memref<1x128xf32, #tpu.memory_space<vmem>>, %arg15: memref<128x32xbf16, #tpu.memory_space<vmem>>, %arg16: memref<1x32xf32, #tpu.memory_space<vmem>>, %arg17: memref<1x8x32xf32, #tpu.memory_space<vmem>>) attributes {dimension_semantics = [#tpu.dimension_semantics<parallel>], iteration_bounds = array<i64: 2>, scalar_prefetch = 0 : i64, scratch_operands = 0 : i64, tpu.core_type = #tpu.core_type<tc>, window_params = [{transform_indices = @transform_0, window_bounds = array<i64: 1, 8, 32>}, {transform_indices = @transform_1, window_bounds = array<i64: 1, 8, 32>}, {transform_indices = @transform_2, window_bounds = array<i64: 1, 8, 32>}, {pipeline_mode = #tpu.pipeline_mode<synchronous>, transform_indices = @transform_3, window_bounds = array<i64: 32, 32>}, {pipeline_mode = #tpu.pipeline_mode<synchronous>, transform_indices = @transform_4, window_bounds = array<i64: 32, 32>}, {pipeline_mode = #tpu.pipeline_mode<synchronous>, transform_indices = @transform_5, window_bounds = array<i64: 32, 32>}, {pipeline_mode = #tpu.pipeline_mode<synchronous>, transform_indices = @transform_6, window_bounds = array<i64: 32, 32>}, {pipeline_mode = #tpu.pipeline_mode<synchronous>, transform_indices = @transform_7, window_bounds = array<i64: 1, 32>}, {pipeline_mode = #tpu.pipeline_mode<synchronous>, transform_indices = @transform_8, window_bounds = array<i64: 1, 32>}, {pipeline_mode = #tpu.pipeline_mode<synchronous>, transform_indices = @transform_9, window_bounds = array<i64: 1, 32>}, {pipeline_mode = #tpu.pipeline_mode<synchronous>, transform_indices = @transform_10, window_bounds = array<i64: 1, 32>}, {pipeline_mode = #tpu.pipeline_mode<synchronous>, transform_indices = @transform_11, window_bounds = array<i64: 1, 32>}, {pipeline_mode = #tpu.pipeline_mode<synchronous>, transform_indices = @transform_12, window_bounds = array<i64: 32, 128>}, {pipeline_mode = #tpu.pipeline_mode<synchronous>, transform_indices = @transform_13, window_bounds = array<i64: 1, 128>}, {pipeline_mode = #tpu.pipeline_mode<synchronous>, transform_indices = @transform_14, window_bounds = array<i64: 128, 32>}, {pipeline_mode = #tpu.pipeline_mode<synchronous>, transform_indices = @transform_15, window_bounds = array<i64: 1, 32>}, {transform_indices = @transform_16, window_bounds = array<i64: 1, 8, 32>}]} {
    %c0 = arith.constant 0 : index
    %c0_0 = arith.constant 0 : index
    %c0_1 = arith.constant 0 : index
    %0 = vector.load %arg3[%c0, %c0_0, %c0_1] : memref<1x8x32xf32, #tpu.memory_space<vmem>>, vector<1x8x32xf32>
    %1 = vector.shape_cast %0 : vector<1x8x32xf32> to vector<8x32xf32>
    %c0_2 = arith.constant 0 : index
    %c0_3 = arith.constant 0 : index
    %c0_4 = arith.constant 0 : index
    %2 = vector.load %arg2[%c0_2, %c0_3, %c0_4] : memref<1x8x32xf32, #tpu.memory_space<vmem>>, vector<1x8x32xf32>
    %3 = vector.shape_cast %2 : vector<1x8x32xf32> to vector<8x32xf32>
    %c0_5 = arith.constant 0 : index
    %c0_6 = arith.constant 0 : index
    %c0_7 = arith.constant 0 : index
    %4 = vector.load %arg1[%c0_5, %c0_6, %c0_7] : memref<1x8x32xf32, #tpu.memory_space<vmem>>, vector<1x8x32xf32>
    %5 = vector.shape_cast %4 : vector<1x8x32xf32> to vector<8x32xf32>
    %6 = arith.truncf %1 : vector<8x32xf32> to vector<8x32xbf16>
    %c0_8 = arith.constant 0 : index
    %c0_9 = arith.constant 0 : index
    %7 = vector.load %arg6[%c0_8, %c0_9] : memref<32x32xbf16, #tpu.memory_space<vmem>>, vector<32x32xbf16>
    %cst = arith.constant dense<0.000000e+00> : vector<8x32xf32>
    %8 = tpu.matmul %6, %7, %cst {dimension_numbers = #tpu.dot_dimension_numbers<[1], [0], [0], [1], [0, 0, 1, 1], [], []>} : vector<8x32xbf16>, vector<32x32xbf16>, vector<8x32xf32> -> vector<8x32xf32>
    %9 = arith.truncf %3 : vector<8x32xf32> to vector<8x32xbf16>
    %c0_10 = arith.constant 0 : index
    %c0_11 = arith.constant 0 : index
    %10 = vector.load %arg5[%c0_10, %c0_11] : memref<32x32xbf16, #tpu.memory_space<vmem>>, vector<32x32xbf16>
    %cst_12 = arith.constant dense<0.000000e+00> : vector<8x32xf32>
    %11 = tpu.matmul %9, %10, %cst_12 {dimension_numbers = #tpu.dot_dimension_numbers<[1], [0], [0], [1], [0, 0, 1, 1], [], []>} : vector<8x32xbf16>, vector<32x32xbf16>, vector<8x32xf32> -> vector<8x32xf32>
    %12 = arith.truncf %5 : vector<8x32xf32> to vector<8x32xbf16>
    %c0_13 = arith.constant 0 : index
    %c0_14 = arith.constant 0 : index
    %13 = vector.load %arg4[%c0_13, %c0_14] : memref<32x32xbf16, #tpu.memory_space<vmem>>, vector<32x32xbf16>
    %cst_15 = arith.constant dense<0.000000e+00> : vector<8x32xf32>
    %14 = tpu.matmul %12, %13, %cst_15 {dimension_numbers = #tpu.dot_dimension_numbers<[1], [0], [0], [1], [0, 0, 1, 1], [], []>} : vector<8x32xbf16>, vector<32x32xbf16>, vector<8x32xf32> -> vector<8x32xf32>
    %15 = vector.shape_cast %8 : vector<8x32xf32> to vector<8x4x8xf32>
    %16 = tpu.transpose %15, [1, 0, 2] : vector<8x4x8xf32> -> vector<4x8x8xf32>
    %17 = arith.truncf %16 : vector<4x8x8xf32> to vector<4x8x8xbf16>
    %18 = vector.shape_cast %11 : vector<8x32xf32> to vector<8x4x8xf32>
    %19 = tpu.transpose %18, [1, 0, 2] : vector<8x4x8xf32> -> vector<4x8x8xf32>
    %20 = arith.truncf %19 : vector<4x8x8xf32> to vector<4x8x8xbf16>
    %21 = vector.shape_cast %14 : vector<8x32xf32> to vector<8x4x8xf32>
    %22 = tpu.transpose %21, [1, 0, 2] : vector<8x4x8xf32> -> vector<4x8x8xf32>
    %23 = arith.truncf %22 : vector<4x8x8xf32> to vector<4x8x8xbf16>
    "tpu.trace_start"() <{level = 10 : i32, message = "hqd,hkd->hqk"}> : () -> ()
    %cst_16 = arith.constant dense<0.000000e+00> : vector<4x8x8xf32>
    %24 = tpu.matmul %17, %20, %cst_16 {dimension_numbers = #tpu.dot_dimension_numbers<[2], [2], [1], [1], [0, 0, 0, 1, 1, 1], [0], [0]>} : vector<4x8x8xbf16>, vector<4x8x8xbf16>, vector<4x8x8xf32> -> vector<4x8x8xf32>
    "tpu.trace_stop"() : () -> ()
    %cst_17 = arith.constant 0.176776692 : f32
    %25 = vector.broadcast %cst_17 : f32 to vector<4x8x8xf32>
    %26 = arith.mulf %24, %25 : vector<4x8x8xf32>
    %cst_18 = arith.constant dense<0xFF800000> : vector<4x8xf32>
    %27 = vector.multi_reduction <maximumf>, %26, %cst_18 [2] : vector<4x8x8xf32> to vector<4x8xf32>
    %28 = vector.shape_cast %27 : vector<4x8xf32> to vector<4x8x1xf32>
    %29 = vector.broadcast %28 : vector<4x8x1xf32> to vector<4x8x8xf32>
    %30 = arith.subf %26, %29 : vector<4x8x8xf32>
    %31 = math.exp %30 : vector<4x8x8xf32>
    %cst_19 = arith.constant dense<0.000000e+00> : vector<4x8xf32>
    %32 = vector.multi_reduction <add>, %31, %cst_19 [2] : vector<4x8x8xf32> to vector<4x8xf32>
    %33 = vector.shape_cast %32 : vector<4x8xf32> to vector<4x8x1xf32>
    %34 = tpu.reciprocal %33 {approx = true} : vector<4x8x1xf32> -> vector<4x8x1xf32>
    %35 = vector.broadcast %34 : vector<4x8x1xf32> to vector<4x8x8xf32>
    %36 = arith.mulf %31, %35 : vector<4x8x8xf32>
    %37 = arith.truncf %36 : vector<4x8x8xf32> to vector<4x8x8xbf16>
    "tpu.trace_start"() <{level = 10 : i32, message = "hqk,hkd->hqd"}> : () -> ()
    %cst_20 = arith.constant dense<0.000000e+00> : vector<4x8x8xf32>
    %38 = tpu.matmul %37, %23, %cst_20 {dimension_numbers = #tpu.dot_dimension_numbers<[2], [1], [1], [2], [0, 0, 0, 1, 1, 2], [0], [0]>} : vector<4x8x8xbf16>, vector<4x8x8xbf16>, vector<4x8x8xf32> -> vector<4x8x8xf32>
    "tpu.trace_stop"() : () -> ()
    %39 = tpu.transpose %38, [1, 0, 2] : vector<4x8x8xf32> -> vector<8x4x8xf32>
    %40 = vector.shape_cast %39 : vector<8x4x8xf32> to vector<8x32xf32>
    %41 = arith.truncf %40 : vector<8x32xf32> to vector<8x32xbf16>
    %c0_21 = arith.constant 0 : index
    %c0_22 = arith.constant 0 : index
    %42 = vector.load %arg7[%c0_21, %c0_22] : memref<32x32xbf16, #tpu.memory_space<vmem>>, vector<32x32xbf16>
    %cst_23 = arith.constant dense<0.000000e+00> : vector<8x32xf32>
    %43 = tpu.matmul %41, %42, %cst_23 {dimension_numbers = #tpu.dot_dimension_numbers<[1], [0], [0], [1], [0, 0, 1, 1], [], []>} : vector<8x32xbf16>, vector<32x32xbf16>, vector<8x32xf32> -> vector<8x32xf32>
    %c0_24 = arith.constant 0 : index
    %c0_25 = arith.constant 0 : index
    %44 = vector.load %arg8[%c0_24, %c0_25] : memref<1x32xf32, #tpu.memory_space<vmem>>, vector<1x32xf32>
    %45 = vector.broadcast %44 : vector<1x32xf32> to vector<8x32xf32>
    %46 = arith.addf %43, %45 : vector<8x32xf32>
    %47 = arith.addf %46, %1 : vector<8x32xf32>
    %c0_26 = arith.constant 0 : index
    %c0_27 = arith.constant 0 : index
    %48 = vector.load %arg9[%c0_26, %c0_27] : memref<1x32xf32, #tpu.memory_space<vmem>>, vector<1x32xf32>
    %c0_28 = arith.constant 0 : index
    %c0_29 = arith.constant 0 : index
    %49 = vector.load %arg10[%c0_28, %c0_29] : memref<1x32xf32, #tpu.memory_space<vmem>>, vector<1x32xf32>
    %cst_30 = arith.constant dense<0.000000e+00> : vector<8xf32>
    %50 = vector.multi_reduction <add>, %47, %cst_30 [1] : vector<8x32xf32> to vector<8xf32>
    %51 = vector.shape_cast %50 : vector<8xf32> to vector<8x1xf32>
    %cst_31 = arith.constant 3.200000e+01 : f32
    %52 = vector.broadcast %cst_31 : f32 to vector<8x1xf32>
    %53 = arith.divf %51, %52 : vector<8x1xf32>
    %54 = vector.broadcast %53 : vector<8x1xf32> to vector<8x32xf32>
    %55 = arith.subf %47, %54 : vector<8x32xf32>
    %56 = vector.broadcast %53 : vector<8x1xf32> to vector<8x32xf32>
    %57 = arith.subf %47, %56 : vector<8x32xf32>
    %58 = arith.mulf %55, %57 : vector<8x32xf32>
    %cst_32 = arith.constant dense<0.000000e+00> : vector<8xf32>
    %59 = vector.multi_reduction <add>, %58, %cst_32 [1] : vector<8x32xf32> to vector<8xf32>
    %60 = vector.shape_cast %59 : vector<8xf32> to vector<8x1xf32>
    %cst_33 = arith.constant 3.200000e+01 : f32
    %61 = vector.broadcast %cst_33 : f32 to vector<8x1xf32>
    %62 = arith.divf %60, %61 : vector<8x1xf32>
    %cst_34 = arith.constant 9.99999974E-6 : f32
    %63 = vector.broadcast %cst_34 : f32 to vector<8x1xf32>
    %64 = arith.addf %62, %63 : vector<8x1xf32>
    %65 = math.rsqrt %64 : vector<8x1xf32>
    %66 = vector.broadcast %53 : vector<8x1xf32> to vector<8x32xf32>
    %67 = arith.subf %47, %66 : vector<8x32xf32>
    %68 = vector.broadcast %65 : vector<8x1xf32> to vector<8x32xf32>
    %69 = arith.mulf %67, %68 : vector<8x32xf32>
    %70 = vector.broadcast %48 : vector<1x32xf32> to vector<8x32xf32>
    %71 = arith.mulf %69, %70 : vector<8x32xf32>
    %72 = vector.broadcast %49 : vector<1x32xf32> to vector<8x32xf32>
    %73 = arith.addf %71, %72 : vector<8x32xf32>
    %74 = arith.truncf %73 : vector<8x32xf32> to vector<8x32xbf16>
    %c0_35 = arith.constant 0 : index
    %c0_36 = arith.constant 0 : index
    %75 = vector.load %arg13[%c0_35, %c0_36] : memref<32x128xbf16, #tpu.memory_space<vmem>>, vector<32x128xbf16>
    %cst_37 = arith.constant dense<0.000000e+00> : vector<8x128xf32>
    %76 = tpu.matmul %74, %75, %cst_37 {dimension_numbers = #tpu.dot_dimension_numbers<[1], [0], [0], [1], [0, 0, 1, 1], [], []>} : vector<8x32xbf16>, vector<32x128xbf16>, vector<8x128xf32> -> vector<8x128xf32>
    %c0_38 = arith.constant 0 : index
    %c0_39 = arith.constant 0 : index
    %77 = vector.load %arg14[%c0_38, %c0_39] : memref<1x128xf32, #tpu.memory_space<vmem>>, vector<1x128xf32>
    %78 = vector.broadcast %77 : vector<1x128xf32> to vector<8x128xf32>
    %79 = arith.addf %76, %78 : vector<8x128xf32>
    %80 = math.tanh %79 : vector<8x128xf32>
    %81 = arith.truncf %80 : vector<8x128xf32> to vector<8x128xbf16>
    %c0_40 = arith.constant 0 : index
    %c0_41 = arith.constant 0 : index
    %82 = vector.load %arg15[%c0_40, %c0_41] : memref<128x32xbf16, #tpu.memory_space<vmem>>, vector<128x32xbf16>
    %cst_42 = arith.constant dense<0.000000e+00> : vector<8x32xf32>
    %83 = tpu.matmul %81, %82, %cst_42 {dimension_numbers = #tpu.dot_dimension_numbers<[1], [0], [0], [1], [0, 0, 1, 1], [], []>} : vector<8x128xbf16>, vector<128x32xbf16>, vector<8x32xf32> -> vector<8x32xf32>
    %c0_43 = arith.constant 0 : index
    %c0_44 = arith.constant 0 : index
    %84 = vector.load %arg16[%c0_43, %c0_44] : memref<1x32xf32, #tpu.memory_space<vmem>>, vector<1x32xf32>
    %85 = vector.broadcast %84 : vector<1x32xf32> to vector<8x32xf32>
    %86 = arith.addf %83, %85 : vector<8x32xf32>
    %87 = arith.addf %86, %73 : vector<8x32xf32>
    %c0_45 = arith.constant 0 : index
    %c0_46 = arith.constant 0 : index
    %88 = vector.load %arg11[%c0_45, %c0_46] : memref<1x32xf32, #tpu.memory_space<vmem>>, vector<1x32xf32>
    %c0_47 = arith.constant 0 : index
    %c0_48 = arith.constant 0 : index
    %89 = vector.load %arg12[%c0_47, %c0_48] : memref<1x32xf32, #tpu.memory_space<vmem>>, vector<1x32xf32>
    %cst_49 = arith.constant dense<0.000000e+00> : vector<8xf32>
    %90 = vector.multi_reduction <add>, %87, %cst_49 [1] : vector<8x32xf32> to vector<8xf32>
    %91 = vector.shape_cast %90 : vector<8xf32> to vector<8x1xf32>
    %cst_50 = arith.constant 3.200000e+01 : f32
    %92 = vector.broadcast %cst_50 : f32 to vector<8x1xf32>
    %93 = arith.divf %91, %92 : vector<8x1xf32>
    %94 = vector.broadcast %93 : vector<8x1xf32> to vector<8x32xf32>
    %95 = arith.subf %87, %94 : vector<8x32xf32>
    %96 = vector.broadcast %93 : vector<8x1xf32> to vector<8x32xf32>
    %97 = arith.subf %87, %96 : vector<8x32xf32>
    %98 = arith.mulf %95, %97 : vector<8x32xf32>
    %cst_51 = arith.constant dense<0.000000e+00> : vector<8xf32>
    %99 = vector.multi_reduction <add>, %98, %cst_51 [1] : vector<8x32xf32> to vector<8xf32>
    %100 = vector.shape_cast %99 : vector<8xf32> to vector<8x1xf32>
    %cst_52 = arith.constant 3.200000e+01 : f32
    %101 = vector.broadcast %cst_52 : f32 to vector<8x1xf32>
    %102 = arith.divf %100, %101 : vector<8x1xf32>
    %cst_53 = arith.constant 9.99999974E-6 : f32
    %103 = vector.broadcast %cst_53 : f32 to vector<8x1xf32>
    %104 = arith.addf %102, %103 : vector<8x1xf32>
    %105 = math.rsqrt %104 : vector<8x1xf32>
    %106 = vector.broadcast %93 : vector<8x1xf32> to vector<8x32xf32>
    %107 = arith.subf %87, %106 : vector<8x32xf32>
    %108 = vector.broadcast %105 : vector<8x1xf32> to vector<8x32xf32>
    %109 = arith.mulf %107, %108 : vector<8x32xf32>
    %110 = vector.broadcast %88 : vector<1x32xf32> to vector<8x32xf32>
    %111 = arith.mulf %109, %110 : vector<8x32xf32>
    %112 = vector.broadcast %89 : vector<1x32xf32> to vector<8x32xf32>
    %113 = arith.addf %111, %112 : vector<8x32xf32>
    %c0_54 = arith.constant 0 : index
    %c0_55 = arith.constant 0 : index
    %c0_56 = arith.constant 0 : index
    %114 = vector.load %arg17[%c0_54, %c0_55, %c0_56] : memref<1x8x32xf32, #tpu.memory_space<vmem>>, vector<1x8x32xf32>
    %115 = vector.shape_cast %114 : vector<1x8x32xf32> to vector<8x32xf32>
    %116 = vector.shape_cast %113 : vector<8x32xf32> to vector<1x8x32xf32>
    tpu.vector_store %arg17[%c0_54, %c0_55, %c0_56], %116 {strides = array<i32>} : memref<1x8x32xf32, #tpu.memory_space<vmem>>, vector<1x8x32xf32>,
    return
  }
  func.func @transform_0(%arg0: i32) -> (i32, i32, i32) {
    %c0_i32 = arith.constant 0 : i32
    %c0_i32_0 = arith.constant 0 : i32
    %c0_i32_1 = arith.constant 0 : i32
    return %arg0, %c0_i32, %c0_i32_0 : i32, i32, i32
  }
  func.func @transform_1(%arg0: i32) -> (i32, i32, i32) {
    %c0_i32 = arith.constant 0 : i32
    %c0_i32_0 = arith.constant 0 : i32
    %c0_i32_1 = arith.constant 0 : i32
    return %arg0, %c0_i32, %c0_i32_0 : i32, i32, i32
  }
  func.func @transform_2(%arg0: i32) -> (i32, i32, i32) {
    %c0_i32 = arith.constant 0 : i32
    %c0_i32_0 = arith.constant 0 : i32
    %c0_i32_1 = arith.constant 0 : i32
    return %arg0, %c0_i32, %c0_i32_0 : i32, i32, i32
  }
  func.func @transform_3(%arg0: i32) -> (i32, i32) {
    %c0_i32 = arith.constant 0 : i32
    %c0_i32_0 = arith.constant 0 : i32
    %c0_i32_1 = arith.constant 0 : i32
    return %c0_i32, %c0_i32_0 : i32, i32
  }
  func.func @transform_4(%arg0: i32) -> (i32, i32) {
    %c0_i32 = arith.constant 0 : i32
    %c0_i32_0 = arith.constant 0 : i32
    %c0_i32_1 = arith.constant 0 : i32
    return %c0_i32, %c0_i32_0 : i32, i32
  }
  func.func @transform_5(%arg0: i32) -> (i32, i32) {
    %c0_i32 = arith.constant 0 : i32
    %c0_i32_0 = arith.constant 0 : i32
    %c0_i32_1 = arith.constant 0 : i32
    return %c0_i32, %c0_i32_0 : i32, i32
  }
  func.func @transform_6(%arg0: i32) -> (i32, i32) {
    %c0_i32 = arith.constant 0 : i32
    %c0_i32_0 = arith.constant 0 : i32
    %c0_i32_1 = arith.constant 0 : i32
    return %c0_i32, %c0_i32_0 : i32, i32
  }
  func.func @transform_7(%arg0: i32) -> (i32, i32) {
    %c0_i32 = arith.constant 0 : i32
    %c0_i32_0 = arith.constant 0 : i32
    %c0_i32_1 = arith.constant 0 : i32
    return %c0_i32, %c0_i32_0 : i32, i32
  }
  func.func @transform_8(%arg0: i32) -> (i32, i32) {
    %c0_i32 = arith.constant 0 : i32
    %c0_i32_0 = arith.constant 0 : i32
    %c0_i32_1 = arith.constant 0 : i32
    return %c0_i32, %c0_i32_0 : i32, i32
  }
  func.func @transform_9(%arg0: i32) -> (i32, i32) {
    %c0_i32 = arith.constant 0 : i32
    %c0_i32_0 = arith.constant 0 : i32
    %c0_i32_1 = arith.constant 0 : i32
    return %c0_i32, %c0_i32_0 : i32, i32
  }
  func.func @transform_10(%arg0: i32) -> (i32, i32) {
    %c0_i32 = arith.constant 0 : i32
    %c0_i32_0 = arith.constant 0 : i32
    %c0_i32_1 = arith.constant 0 : i32
    return %c0_i32, %c0_i32_0 : i32, i32
  }
  func.func @transform_11(%arg0: i32) -> (i32, i32) {
    %c0_i32 = arith.constant 0 : i32
    %c0_i32_0 = arith.constant 0 : i32
    %c0_i32_1 = arith.constant 0 : i32
    return %c0_i32, %c0_i32_0 : i32, i32
  }
  func.func @transform_12(%arg0: i32) -> (i32, i32) {
    %c0_i32 = arith.constant 0 : i32
    %c0_i32_0 = arith.constant 0 : i32
    %c0_i32_1 = arith.constant 0 : i32
    return %c0_i32, %c0_i32_0 : i32, i32
  }
  func.func @transform_13(%arg0: i32) -> (i32, i32) {
    %c0_i32 = arith.constant 0 : i32
    %c0_i32_0 = arith.constant 0 : i32
    %c0_i32_1 = arith.constant 0 : i32
    return %c0_i32, %c0_i32_0 : i32, i32
  }
  func.func @transform_14(%arg0: i32) -> (i32, i32) {
    %c0_i32 = arith.constant 0 : i32
    %c0_i32_0 = arith.constant 0 : i32
    %c0_i32_1 = arith.constant 0 : i32
    return %c0_i32, %c0_i32_0 : i32, i32
  }
  func.func @transform_15(%arg0: i32) -> (i32, i32) {
    %c0_i32 = arith.constant 0 : i32
    %c0_i32_0 = arith.constant 0 : i32
    %c0_i32_1 = arith.constant 0 : i32
    return %c0_i32, %c0_i32_0 : i32, i32
  }
  func.func @transform_16(%arg0: i32) -> (i32, i32, i32) {
    %c0_i32 = arith.constant 0 : i32
    %c0_i32_0 = arith.constant 0 : i32
    %c0_i32_1 = arith.constant 0 : i32
    return %arg0, %c0_i32, %c0_i32_0 : i32, i32, i32
  }
}

</mosaic_0001>

<llo_original>
// kernel: tpu_custom_call.1
$region0: #{tpu_custom_call.1}
  #allocation0 [shape = 'u32[]', space=smem, size = 0x4, offset = 0x4, fixed_abs, tag = 'smem constant byte address 0x4 - core index']
  #allocation1 [shape = 'u32[72,128]{1,0:T(1,128)}', space=vmem, size = 0x9000, scoped, tag = 'internal scratch']
  %s0 = inlined_call_operand.vmem [shape: f32[2,8,32], index: 0, kind: input, shape index: {}]
  %s1 = inlined_call_operand.vmem [shape: f32[2,8,32], index: 1, kind: input, shape index: {}]
  %s2 = inlined_call_operand.vmem [shape: f32[2,8,32], index: 2, kind: input, shape index: {}]
  %s3 = inlined_call_operand.vmem [shape: bf16[32,32], index: 3, kind: input, shape index: {}]
  %s4 = inlined_call_operand.vmem [shape: bf16[32,32], index: 4, kind: input, shape index: {}]
  %s5 = inlined_call_operand.hbm [shape: bf16[32,32], index: 5, kind: input, shape index: {}]
  %s6 = inlined_call_operand.hbm [shape: bf16[32,32], index: 6, kind: input, shape index: {}]
  %s7 = inlined_call_operand.vmem [shape: f32[1,32], index: 7, kind: input, shape index: {}]
  %s8 = inlined_call_operand.vmem [shape: f32[1,32], index: 8, kind: input, shape index: {}]
  %s9 = inlined_call_operand.vmem [shape: f32[1,32], index: 9, kind: input, shape index: {}]
  %s10 = inlined_call_operand.vmem [shape: f32[1,32], index: 10, kind: input, shape index: {}]
  %s11 = inlined_call_operand.vmem [shape: f32[1,32], index: 11, kind: input, shape index: {}]
  %s12 = inlined_call_operand.hbm [shape: bf16[32,128], index: 12, kind: input, shape index: {}]
  %s13 = inlined_call_operand.vmem [shape: f32[1,128], index: 13, kind: input, shape index: {}]
  %s14 = inlined_call_operand.vmem [shape: bf16[128,32], index: 14, kind: input, shape index: {}]
  %s15 = inlined_call_operand.vmem [shape: f32[1,32], index: 15, kind: input, shape index: {}]
  %s16 = inlined_call_operand.hbm [shape: f32[2,8,32], index: 16, kind: output, shape index: {}]
  %s17 = sld [smem:[#allocation0]]
  $region109: #{tpu_custom_call.1} parent=0
    _
  %s19 = ssub.s32 1, %s17
  %s20 = scalar_select 0, %s19, %s17
  $region1: #{tpu_custom_call.1} parent=0
    #allocation2 [shape = 'u8[8192]{0}', space=vmem, size = 0x2000, scoped, tag = 'input window, operand 5, single buffered']
    #allocation3 [shape = 's32[2]{0}', space=sflag, size = 0x8, scoped, tag = 'scoped memory for tpu_custom_call.1']
    #allocation4 [shape = 's32[2]{0}', space=sflag, size = 0x8, scoped, tag = 'scoped memory for tpu_custom_call.1']
    #allocation5 [shape = 'u8[8192]{0}', space=vmem, size = 0x2000, scoped, tag = 'input window, operand 6, single buffered']
    #allocation6 [shape = 's32[1]{0}', space=sflag, size = 0x4, scoped, tag = 'scoped memory for tpu_custom_call.1']
    #allocation7 [shape = 'u8[8192]{0}', space=vmem, size = 0x2000, scoped, tag = 'input window, operand 12, single buffered']
    #allocation8 [shape = 'u8[8192]{0}', space=vmem, size = 0x2000, scoped, tag = 'output window, operand 0']
    %21 = vsyncpa [#allocation3], 0
    %22 = vsyncpa [#allocation6], 0
    %23 = vsyncpa [#allocation4], 0
    %s24 = scalar_lea.sflag [#allocation4], 1
    %25 = vsyncpa %s24, 0
    loop: start=0, step=1, limit=4
    $region2: #{tpu_custom_call.1} parent=1 // loop_pre_header
      _
    $region3: #{tpu_custom_call.1} parent=1 // loop_header
      %s27 = sphi 0, %s31
      %p28 = scmp.ge.s32.totalorder %s27, 4
      %s37 = sphi 0, %s39
      %s40 = sphi 0, %s37
      %s41 = sphi 0, %s40
      %s57 = sphi 0, %s41
      %s63 = sphi 0, %s65
      %s66 = sphi 0, %s63
      %s67 = sphi 0, %s66
      %s83 = sphi 0, %s67
      %s89 = sphi 0, %s91
      %s92 = sphi 0, %s89
      %s93 = sphi 0, %s92
      %s109 = sphi 0, %s93
      %s113 = sphi 0, %s113
      %s115 = sphi 0, %s113
      %s116 = sphi 0, %s115
      %s130 = sphi 0, %s116
      %s134 = sphi 0, %s134
      %s136 = sphi 0, %s134
      %s137 = sphi 0, %s136
      %s151 = sphi 0, %s137
      %s155 = sphi 0, %s155
      %s157 = sphi 0, %s155
      %s158 = sphi 0, %s157
      %s172 = sphi 0, %s158
      %s176 = sphi 0, %s176
      %s178 = sphi 0, %s176
      %s179 = sphi 0, %s178
      %s193 = sphi 0, %s179
      %s197 = sphi 0, %s197
      %s199 = sphi 0, %s197
      %s200 = sphi 0, %s199
      %s214 = sphi 0, %s200
      %s218 = sphi 0, %s218
      %s220 = sphi 0, %s218
      %s221 = sphi 0, %s220
      %s235 = sphi 0, %s221
      %s239 = sphi 0, %s239
      %s241 = sphi 0, %s239
      %s242 = sphi 0, %s241
      %s256 = sphi 0, %s242
      %s260 = sphi 0, %s260
      %s262 = sphi 0, %s260
      %s263 = sphi 0, %s262
      %s277 = sphi 0, %s263
      %s281 = sphi 0, %s281
      %s283 = sphi 0, %s281
      %s284 = sphi 0, %s283
      %s298 = sphi 0, %s284
      %s302 = sphi 0, %s302
      %s304 = sphi 0, %s302
      %s305 = sphi 0, %s304
      %s319 = sphi 0, %s305
      %s323 = sphi 0, %s323
      %s325 = sphi 0, %s323
      %s326 = sphi 0, %s325
      %s340 = sphi 0, %s326
      %s344 = sphi 0, %s344
      %s346 = sphi 0, %s344
      %s347 = sphi 0, %s346
      %s361 = sphi 0, %s347
      %s365 = sphi 0, %s365
      %s367 = sphi 0, %s365
      %s368 = sphi 0, %s367
      %s382 = sphi 0, %s368
      %s388 = sphi 0, %s390
      %s391 = sphi 0, %s388
      %s392 = sphi 0, %s391
      %s408 = sphi 0, %s392
    $region4: #{tpu_custom_call.1} parent=1 // loop_header_branch
      %30 = sbr.rel (%p28) target = $region8
    $region5: #{tpu_custom_call.1} parent=1 // loop_body
      %s32 = ssub.s32 %s27, 1
      %s33 = ssub.s32 %s27, 2
      %s34 = sadd.s32 %s27, 1
      %s35 = ssub.s32 %s27, %s34
      %p36 = scmp.eq.s32.totalorder %s35, 0
      %s38 = sadd.s32 %s37, 1
      %s39 = scalar_select %p36, %s37, %s38
      %p42 = pneg %p36
      %p43 = scmp.eq.s32.totalorder %s27, 1
      %p44 = por %p42, %p43
      %p45 = scmp.ne.s32.totalorder %s37, %s40
      %p46 = scmp.eq.s32.totalorder %s27, 0
      %p47 = por %p45, %p46
      %p48 = scmp.ne.s32.totalorder %s37, %s40
      %p49 = scmp.eq.s32.totalorder %s32, 1
      %p50 = por %p48, %p49
      %p51 = scmp.ne.s32.totalorder %s40, %s41
      %p52 = scmp.eq.s32.totalorder %s32, 0
      %p53 = por %p51, %p52
      %p54 = scmp.ne.s32.totalorder %s40, %s41
      %p55 = scmp.eq.s32.totalorder %s33, 1
      %p56 = por %p54, %p55
      %p58 = scmp.ne.s32.totalorder %s41, %s57
      %p59 = scmp.eq.s32.totalorder %s33, 0
      %p60 = por %p58, %p59
      %s61 = ssub.s32 %s27, %s34
      %p62 = scmp.eq.s32.totalorder %s61, 0
      %s64 = sadd.s32 %s63, 1
      %s65 = scalar_select %p62, %s63, %s64
      %p68 = pneg %p62
      %p69 = scmp.eq.s32.totalorder %s27, 1
      %p70 = por %p68, %p69
      %p71 = scmp.ne.s32.totalorder %s63, %s66
      %p72 = scmp.eq.s32.totalorder %s27, 0
      %p73 = por %p71, %p72
      %p74 = scmp.ne.s32.totalorder %s63, %s66
      %p75 = scmp.eq.s32.totalorder %s32, 1
      %p76 = por %p74, %p75
      %p77 = scmp.ne.s32.totalorder %s66, %s67
      %p78 = scmp.eq.s32.totalorder %s32, 0
      %p79 = por %p77, %p78
      %p80 = scmp.ne.s32.totalorder %s66, %s67
      %p81 = scmp.eq.s32.totalorder %s33, 1
      %p82 = por %p80, %p81
      %p84 = scmp.ne.s32.totalorder %s67, %s83
      %p85 = scmp.eq.s32.totalorder %s33, 0
      %p86 = por %p84, %p85
      %s87 = ssub.s32 %s27, %s34
      %p88 = scmp.eq.s32.totalorder %s87, 0
      %s90 = sadd.s32 %s89, 1
      %s91 = scalar_select %p88, %s89, %s90
      %p94 = pneg %p88
      %p95 = scmp.eq.s32.totalorder %s27, 1
      %p96 = por %p94, %p95
      %p97 = scmp.ne.s32.totalorder %s89, %s92
      %p98 = scmp.eq.s32.totalorder %s27, 0
      %p99 = por %p97, %p98
      %p100 = scmp.ne.s32.totalorder %s89, %s92
      %p101 = scmp.eq.s32.totalorder %s32, 1
      %p102 = por %p100, %p101
      %p103 = scmp.ne.s32.totalorder %s92, %s93
      %p104 = scmp.eq.s32.totalorder %s32, 0
      %p105 = por %p103, %p104
      %p106 = scmp.ne.s32.totalorder %s92, %s93
      %p107 = scmp.eq.s32.totalorder %s33, 1
      %p108 = por %p106, %p107
      %p110 = scmp.ne.s32.totalorder %s93, %s109
      %p111 = scmp.eq.s32.totalorder %s33, 0
      %p112 = por %p110, %p111
      %s114 = sadd.s32 %s113, 1
      %p117 = scmp.eq.s32.totalorder %s27, 1
      %p118 = scmp.ne.s32.totalorder %s113, %s115
      %p119 = scmp.eq.s32.totalorder %s27, 0
      %p120 = por %p118, %p119
      %p121 = scmp.ne.s32.totalorder %s113, %s115
      %p122 = scmp.eq.s32.totalorder %s32, 1
      %p123 = por %p121, %p122
      %p124 = scmp.ne.s32.totalorder %s115, %s116
      %p125 = scmp.eq.s32.totalorder %s32, 0
      %p126 = por %p124, %p125
      %p127 = scmp.ne.s32.totalorder %s115, %s116
      %p128 = scmp.eq.s32.totalorder %s33, 1
      %p129 = por %p127, %p128
      %p131 = scmp.ne.s32.totalorder %s116, %s130
      %p132 = scmp.eq.s32.totalorder %s33, 0
      %p133 = por %p131, %p132
      %s135 = sadd.s32 %s134, 1
      %p138 = scmp.eq.s32.totalorder %s27, 1
      %p139 = scmp.ne.s32.totalorder %s134, %s136
      %p140 = scmp.eq.s32.totalorder %s27, 0
      %p141 = por %p139, %p140
      %p142 = scmp.ne.s32.totalorder %s134, %s136
      %p143 = scmp.eq.s32.totalorder %s32, 1
      %p144 = por %p142, %p143
      %p145 = scmp.ne.s32.totalorder %s136, %s137
      %p146 = scmp.eq.s32.totalorder %s32, 0
      %p147 = por %p145, %p146
      %p148 = scmp.ne.s32.totalorder %s136, %s137
      %p149 = scmp.eq.s32.totalorder %s33, 1
      %p150 = por %p148, %p149
      %p152 = scmp.ne.s32.totalorder %s137, %s151
      %p153 = scmp.eq.s32.totalorder %s33, 0
      %p154 = por %p152, %p153
      %s156 = sadd.s32 %s155, 1
      %p159 = scmp.eq.s32.totalorder %s27, 1
      %p160 = scmp.ne.s32.totalorder %s155, %s157
      %p161 = scmp.eq.s32.totalorder %s27, 0
      %p162 = por %p160, %p161
      %p163 = scmp.ne.s32.totalorder %s155, %s157
      %p164 = scmp.eq.s32.totalorder %s32, 1
      %p165 = por %p163, %p164
      %p166 = scmp.ne.s32.totalorder %s157, %s158
      %p167 = scmp.eq.s32.totalorder %s32, 0
      %p168 = por %p166, %p167
      %p169 = scmp.ne.s32.totalorder %s157, %s158
      %p170 = scmp.eq.s32.totalorder %s33, 1
      %p171 = por %p169, %p170
      %p173 = scmp.ne.s32.totalorder %s158, %s172
      %p174 = scmp.eq.s32.totalorder %s33, 0
      %p175 = por %p173, %p174
      %s177 = sadd.s32 %s176, 1
      %p180 = scmp.eq.s32.totalorder %s27, 1
      %p181 = scmp.ne.s32.totalorder %s176, %s178
      %p182 = scmp.eq.s32.totalorder %s27, 0
      %p183 = por %p181, %p182
      %p184 = scmp.ne.s32.totalorder %s176, %s178
      %p185 = scmp.eq.s32.totalorder %s32, 1
      %p186 = por %p184, %p185
      %p187 = scmp.ne.s32.totalorder %s178, %s179
      %p188 = scmp.eq.s32.totalorder %s32, 0
      %p189 = por %p187, %p188
      %p190 = scmp.ne.s32.totalorder %s178, %s179
      %p191 = scmp.eq.s32.totalorder %s33, 1
      %p192 = por %p190, %p191
      %p194 = scmp.ne.s32.totalorder %s179, %s193
      %p195 = scmp.eq.s32.totalorder %s33, 0
      %p196 = por %p194, %p195
      %s198 = sadd.s32 %s197, 1
      %p201 = scmp.eq.s32.totalorder %s27, 1
      %p202 = scmp.ne.s32.totalorder %s197, %s199
      %p203 = scmp.eq.s32.totalorder %s27, 0
      %p204 = por %p202, %p203
      %p205 = scmp.ne.s32.totalorder %s197, %s199
      %p206 = scmp.eq.s32.totalorder %s32, 1
      %p207 = por %p205, %p206
      %p208 = scmp.ne.s32.totalorder %s199, %s200
      %p209 = scmp.eq.s32.totalorder %s32, 0
      %p210 = por %p208, %p209
      %p211 = scmp.ne.s32.totalorder %s199, %s200
      %p212 = scmp.eq.s32.totalorder %s33, 1
      %p213 = por %p211, %p212
      %p215 = scmp.ne.s32.totalorder %s200, %s214
      %p216 = scmp.eq.s32.totalorder %s33, 0
      %p217 = por %p215, %p216
      %s219 = sadd.s32 %s218, 1
      %p222 = scmp.eq.s32.totalorder %s27, 1
      %p223 = scmp.ne.s32.totalorder %s218, %s220
      %p224 = scmp.eq.s32.totalorder %s27, 0
      %p225 = por %p223, %p224
      %p226 = scmp.ne.s32.totalorder %s218, %s220
      %p227 = scmp.eq.s32.totalorder %s32, 1
      %p228 = por %p226, %p227
      %p229 = scmp.ne.s32.totalorder %s220, %s221
      %p230 = scmp.eq.s32.totalorder %s32, 0
      %p231 = por %p229, %p230
      %p232 = scmp.ne.s32.totalorder %s220, %s221
      %p233 = scmp.eq.s32.totalorder %s33, 1
      %p234 = por %p232, %p233
      %p236 = scmp.ne.s32.totalorder %s221, %s235
      %p237 = scmp.eq.s32.totalorder %s33, 0
      %p238 = por %p236, %p237
      %s240 = sadd.s32 %s239, 1
      %p243 = scmp.eq.s32.totalorder %s27, 1
      %p244 = scmp.ne.s32.totalorder %s239, %s241
      %p245 = scmp.eq.s32.totalorder %s27, 0
      %p246 = por %p244, %p245
      %p247 = scmp.ne.s32.totalorder %s239, %s241
      %p248 = scmp.eq.s32.totalorder %s32, 1
      %p249 = por %p247, %p248
      %p250 = scmp.ne.s32.totalorder %s241, %s242
      %p251 = scmp.eq.s32.totalorder %s32, 0
      %p252 = por %p250, %p251
      %p253 = scmp.ne.s32.totalorder %s241, %s242
      %p254 = scmp.eq.s32.totalorder %s33, 1
      %p255 = por %p253, %p254
      %p257 = scmp.ne.s32.totalorder %s242, %s256
      %p258 = scmp.eq.s32.totalorder %s33, 0
      %p259 = por %p257, %p258
      %s261 = sadd.s32 %s260, 1
      %p264 = scmp.eq.s32.totalorder %s27, 1
      %p265 = scmp.ne.s32.totalorder %s260, %s262
      %p266 = scmp.eq.s32.totalorder %s27, 0
      %p267 = por %p265, %p266
      %p268 = scmp.ne.s32.totalorder %s260, %s262
      %p269 = scmp.eq.s32.totalorder %s32, 1
      %p270 = por %p268, %p269
      %p271 = scmp.ne.s32.totalorder %s262, %s263
      %p272 = scmp.eq.s32.totalorder %s32, 0
      %p273 = por %p271, %p272
      %p274 = scmp.ne.s32.totalorder %s262, %s263
      %p275 = scmp.eq.s32.totalorder %s33, 1
      %p276 = por %p274, %p275
      %p278 = scmp.ne.s32.totalorder %s263, %s277
      %p279 = scmp.eq.s32.totalorder %s33, 0
      %p280 = por %p278, %p279
      %s282 = sadd.s32 %s281, 1
      %p285 = scmp.eq.s32.totalorder %s27, 1
      %p286 = scmp.ne.s32.totalorder %s281, %s283
      %p287 = scmp.eq.s32.totalorder %s27, 0
      %p288 = por %p286, %p287
      %p289 = scmp.ne.s32.totalorder %s281, %s283
      %p290 = scmp.eq.s32.totalorder %s32, 1
      %p291 = por %p289, %p290
      %p292 = scmp.ne.s32.totalorder %s283, %s284
      %p293 = scmp.eq.s32.totalorder %s32, 0
      %p294 = por %p292, %p293
      %p295 = scmp.ne.s32.totalorder %s283, %s284
      %p296 = scmp.eq.s32.totalorder %s33, 1
      %p297 = por %p295, %p296
      %p299 = scmp.ne.s32.totalorder %s284, %s298
      %p300 = scmp.eq.s32.totalorder %s33, 0
      %p301 = por %p299, %p300
      %s303 = sadd.s32 %s302, 1
      %p306 = scmp.eq.s32.totalorder %s27, 1
      %p307 = scmp.ne.s32.totalorder %s302, %s304
      %p308 = scmp.eq.s32.totalorder %s27, 0
      %p309 = por %p307, %p308
      %p310 = scmp.ne.s32.totalorder %s302, %s304
      %p311 = scmp.eq.s32.totalorder %s32, 1
      %p312 = por %p310, %p311
      %p313 = scmp.ne.s32.totalorder %s304, %s305
      %p314 = scmp.eq.s32.totalorder %s32, 0
      %p315 = por %p313, %p314
      %p316 = scmp.ne.s32.totalorder %s304, %s305
      %p317 = scmp.eq.s32.totalorder %s33, 1
      %p318 = por %p316, %p317
      %p320 = scmp.ne.s32.totalorder %s305, %s319
      %p321 = scmp.eq.s32.totalorder %s33, 0
      %p322 = por %p320, %p321
      %s324 = sadd.s32 %s323, 1
      %p327 = scmp.eq.s32.totalorder %s27, 1
      %p328 = scmp.ne.s32.totalorder %s323, %s325
      %p329 = scmp.eq.s32.totalorder %s27, 0
      %p330 = por %p328, %p329
      %p331 = scmp.ne.s32.totalorder %s323, %s325
      %p332 = scmp.eq.s32.totalorder %s32, 1
      %p333 = por %p331, %p332
      %p334 = scmp.ne.s32.totalorder %s325, %s326
      %p335 = scmp.eq.s32.totalorder %s32, 0
      %p336 = por %p334, %p335
      %p337 = scmp.ne.s32.totalorder %s325, %s326
      %p338 = scmp.eq.s32.totalorder %s33, 1
      %p339 = por %p337, %p338
      %p341 = scmp.ne.s32.totalorder %s326, %s340
      %p342 = scmp.eq.s32.totalorder %s33, 0
      %p343 = por %p341, %p342
      %s345 = sadd.s32 %s344, 1
      %p348 = scmp.eq.s32.totalorder %s27, 1
      %p349 = scmp.ne.s32.totalorder %s344, %s346
      %p350 = scmp.eq.s32.totalorder %s27, 0
      %p351 = por %p349, %p350
      %p352 = scmp.ne.s32.totalorder %s344, %s346
      %p353 = scmp.eq.s32.totalorder %s32, 1
      %p354 = por %p352, %p353
      %p355 = scmp.ne.s32.totalorder %s346, %s347
      %p356 = scmp.eq.s32.totalorder %s32, 0
      %p357 = por %p355, %p356
      %p358 = scmp.ne.s32.totalorder %s346, %s347
      %p359 = scmp.eq.s32.totalorder %s33, 1
      %p360 = por %p358, %p359
      %p362 = scmp.ne.s32.totalorder %s347, %s361
      %p363 = scmp.eq.s32.totalorder %s33, 0
      %p364 = por %p362, %p363
      %s366 = sadd.s32 %s365, 1
      %p369 = scmp.eq.s32.totalorder %s27, 1
      %p370 = scmp.ne.s32.totalorder %s365, %s367
      %p371 = scmp.eq.s32.totalorder %s27, 0
      %p372 = por %p370, %p371
      %p373 = scmp.ne.s32.totalorder %s365, %s367
      %p374 = scmp.eq.s32.totalorder %s32, 1
      %p375 = por %p373, %p374
      %p376 = scmp.ne.s32.totalorder %s367, %s368
      %p377 = scmp.eq.s32.totalorder %s32, 0
      %p378 = por %p376, %p377
      %p379 = scmp.ne.s32.totalorder %s367, %s368
      %p380 = scmp.eq.s32.totalorder %s33, 1
      %p381 = por %p379, %p380
      %p383 = scmp.ne.s32.totalorder %s368, %s382
      %p384 = scmp.eq.s32.totalorder %s33, 0
      %p385 = por %p383, %p384
      %s386 = ssub.s32 %s27, %s34
      %p387 = scmp.eq.s32.totalorder %s386, 0
      %s389 = sadd.s32 %s388, 1
      %s390 = scalar_select %p387, %s388, %s389
      %p393 = pneg %p387
      %p394 = scmp.eq.s32.totalorder %s27, 1
      %p395 = por %p393, %p394
      %p396 = scmp.ne.s32.totalorder %s388, %s391
      %p397 = scmp.eq.s32.totalorder %s27, 0
      %p398 = por %p396, %p397
      %p399 = scmp.ne.s32.totalorder %s388, %s391
      %p400 = scmp.eq.s32.totalorder %s32, 1
      %p401 = por %p399, %p400
      %p402 = scmp.ne.s32.totalorder %s391, %s392
      %p403 = scmp.eq.s32.totalorder %s32, 0
      %p404 = por %p402, %p403
      %p405 = scmp.ne.s32.totalorder %s391, %s392
      %p406 = scmp.eq.s32.totalorder %s33, 1
      %p407 = por %p405, %p406
      %p409 = scmp.ne.s32.totalorder %s392, %s408
      %p410 = scmp.eq.s32.totalorder %s33, 0
      %p411 = por %p409, %p410
      %p412 = scmp.le.s32.totalorder 1, %s27
      %p413 = scmp.lt.s32.totalorder %s27, 3
      %p414 = pnand %p412, %p413
      %p415 = pneg %p414
      // Predicated region
      $region9: #{tpu_custom_call.1} parent=5 // pred_check
        _
      $region10: #{tpu_custom_call.1} parent=5 // pred_check_branch
        %417 = sbr.rel (%p414) target = $region12
      $region11: #{tpu_custom_call.1} parent=5 // pred_region
        %s418 = ssub.s32 %s27, 1
        // Predicated region
        $region13: #{tpu_custom_call.1} parent=11 // pred_check
          %p419 = pneg %p126
        $region14: #{tpu_custom_call.1} parent=11 // pred_check_branch
          %421 = sbr.rel (%p419) target = $region16
        $region15: #{tpu_custom_call.1} parent=11 // pred_region
          _
        $region16: #{tpu_custom_call.1} parent=11 // pred_fallthru
          _
        // Predicated region
        $region17: #{tpu_custom_call.1} parent=11 // pred_check
          %p422 = pneg %p147
        $region18: #{tpu_custom_call.1} parent=11 // pred_check_branch
          %424 = sbr.rel (%p422) target = $region20
        $region19: #{tpu_custom_call.1} parent=11 // pred_region
          _
        $region20: #{tpu_custom_call.1} parent=11 // pred_fallthru
          _
        // Predicated region
        $region21: #{tpu_custom_call.1} parent=11 // pred_check
          %p425 = pneg %p168
        $region22: #{tpu_custom_call.1} parent=11 // pred_check_branch
          %427 = sbr.rel (%p425) target = $region24
        $region23: #{tpu_custom_call.1} parent=11 // pred_region
          %429 = vsyncadd [#allocation3], 0
          %s430 = sshll.u32 %s5, 4
          %s431 = int_to_ptr.hbm [resolvable:$true] %s430
          %s432 = sshll.u32 [#allocation2], 4
          %s433 = int_to_ptr.vmem [resolvable:$true] %s432
          %438 = dma.hbm_to_vmem [thread:$0]  %s431, 256, %s433, [#allocation3], 64, 64, 4
        $region24: #{tpu_custom_call.1} parent=11 // pred_fallthru
          _
        // Predicated region
        $region25: #{tpu_custom_call.1} parent=11 // pred_check
          %p439 = pneg %p189
        $region26: #{tpu_custom_call.1} parent=11 // pred_check_branch
          %441 = sbr.rel (%p439) target = $region28
        $region27: #{tpu_custom_call.1} parent=11 // pred_region
          %443 = vsyncadd [#allocation6], 0
          %s444 = sshll.u32 %s6, 4
          %s445 = int_to_ptr.hbm [resolvable:$true] %s444
          %s446 = sshll.u32 [#allocation5], 4
          %s447 = int_to_ptr.vmem [resolvable:$true] %s446
          %452 = dma.hbm_to_vmem [thread:$0]  %s445, 256, %s447, [#allocation6], 64, 64, 4
        $region28: #{tpu_custom_call.1} parent=11 // pred_fallthru
          _
        // Predicated region
        $region29: #{tpu_custom_call.1} parent=11 // pred_check
          %p453 = pneg %p210
        $region30: #{tpu_custom_call.1} parent=11 // pred_check_branch
          %455 = sbr.rel (%p453) target = $region32
        $region31: #{tpu_custom_call.1} parent=11 // pred_region
          _
        $region32: #{tpu_custom_call.1} parent=11 // pred_fallthru
          _
        // Predicated region
        $region33: #{tpu_custom_call.1} parent=11 // pred_check
          %p456 = pneg %p231
        $region34: #{tpu_custom_call.1} parent=11 // pred_check_branch
          %458 = sbr.rel (%p456) target = $region36
        $region35: #{tpu_custom_call.1} parent=11 // pred_region
          _
        $region36: #{tpu_custom_call.1} parent=11 // pred_fallthru
          _
        // Predicated region
        $region37: #{tpu_custom_call.1} parent=11 // pred_check
          %p459 = pneg %p252
        $region38: #{tpu_custom_call.1} parent=11 // pred_check_branch
          %461 = sbr.rel (%p459) target = $region40
        $region39: #{tpu_custom_call.1} parent=11 // pred_region
          _
        $region40: #{tpu_custom_call.1} parent=11 // pred_fallthru
          _
        // Predicated region
        $region41: #{tpu_custom_call.1} parent=11 // pred_check
          %p462 = pneg %p273
        $region42: #{tpu_custom_call.1} parent=11 // pred_check_branch
          %464 = sbr.rel (%p462) target = $region44
        $region43: #{tpu_custom_call.1} parent=11 // pred_region
          _
        $region44: #{tpu_custom_call.1} parent=11 // pred_fallthru
          _
        // Predicated region
        $region45: #{tpu_custom_call.1} parent=11 // pred_check
          %p465 = pneg %p294
        $region46: #{tpu_custom_call.1} parent=11 // pred_check_branch
          %467 = sbr.rel (%p465) target = $region48
        $region47: #{tpu_custom_call.1} parent=11 // pred_region
          _
        $region48: #{tpu_custom_call.1} parent=11 // pred_fallthru
          _
        // Predicated region
        $region49: #{tpu_custom_call.1} parent=11 // pred_check
          %p468 = pneg %p315
        $region50: #{tpu_custom_call.1} parent=11 // pred_check_branch
          %470 = sbr.rel (%p468) target = $region52
        $region51: #{tpu_custom_call.1} parent=11 // pred_region
          %472 = vsyncadd [#allocation6], 0
          %s473 = sshll.u32 %s12, 4
          %s474 = int_to_ptr.hbm [resolvable:$true] %s473
          %s475 = sshll.u32 [#allocation7], 4
          %s476 = int_to_ptr.vmem [resolvable:$true] %s475
          %481 = dma.hbm_to_vmem [thread:$0]  %s474, 256, %s476, [#allocation6], 64, 64, 4
        $region52: #{tpu_custom_call.1} parent=11 // pred_fallthru
          _
        // Predicated region
        $region53: #{tpu_custom_call.1} parent=11 // pred_check
          %p482 = pneg %p336
        $region54: #{tpu_custom_call.1} parent=11 // pred_check_branch
          %484 = sbr.rel (%p482) target = $region56
        $region55: #{tpu_custom_call.1} parent=11 // pred_region
          _
        $region56: #{tpu_custom_call.1} parent=11 // pred_fallthru
          _
        // Predicated region
        $region57: #{tpu_custom_call.1} parent=11 // pred_check
          %p485 = pneg %p357
        $region58: #{tpu_custom_call.1} parent=11 // pred_check_branch
          %487 = sbr.rel (%p485) target = $region60
        $region59: #{tpu_custom_call.1} parent=11 // pred_region
          _
        $region60: #{tpu_custom_call.1} parent=11 // pred_fallthru
          _
        // Predicated region
        $region61: #{tpu_custom_call.1} parent=11 // pred_check
          %p488 = pneg %p378
        $region62: #{tpu_custom_call.1} parent=11 // pred_check_branch
          %490 = sbr.rel (%p488) target = $region64
        $region63: #{tpu_custom_call.1} parent=11 // pred_region
          _
        $region64: #{tpu_custom_call.1} parent=11 // pred_fallthru
          _
      $region12: #{tpu_custom_call.1} parent=5 // pred_fallthru
        _
      %p491 = scmp.lt.s32.totalorder %s27, 2
      // Predicated region
      $region65: #{tpu_custom_call.1} parent=5 // pred_check
        %p492 = pneg %p491
      $region66: #{tpu_custom_call.1} parent=5 // pred_check_branch
        %494 = sbr.rel (%p492) target = $region68
      $region67: #{tpu_custom_call.1} parent=5 // pred_region
        // Predicated region
        $region69: #{tpu_custom_call.1} parent=67 // pred_check
          %p495 = pneg %p47
        $region70: #{tpu_custom_call.1} parent=67 // pred_check_branch
          %497 = sbr.rel (%p495) target = $region72
        $region71: #{tpu_custom_call.1} parent=67 // pred_region
          %p498 = scmp.lt.s32.totalorder %s27, 1
          %s499 = scalar_select %p498, %s27, 1
          %s500 = smul.addr %s499, 8
          %s501 = scalar_lea.vmem %s0, %s500
        $region72: #{tpu_custom_call.1} parent=67 // pred_fallthru
          _
        // Predicated region
        $region73: #{tpu_custom_call.1} parent=67 // pred_check
          %p502 = pneg %p73
        $region74: #{tpu_custom_call.1} parent=67 // pred_check_branch
          %504 = sbr.rel (%p502) target = $region76
        $region75: #{tpu_custom_call.1} parent=67 // pred_region
          %p505 = scmp.lt.s32.totalorder %s27, 1
          %s506 = scalar_select %p505, %s27, 1
          %s507 = smul.addr %s506, 8
          %s508 = scalar_lea.vmem %s1, %s507
        $region76: #{tpu_custom_call.1} parent=67 // pred_fallthru
          _
        // Predicated region
        $region77: #{tpu_custom_call.1} parent=67 // pred_check
          %p509 = pneg %p99
        $region78: #{tpu_custom_call.1} parent=67 // pred_check_branch
          %511 = sbr.rel (%p509) target = $region80
        $region79: #{tpu_custom_call.1} parent=67 // pred_region
          %p512 = scmp.lt.s32.totalorder %s27, 1
          %s513 = scalar_select %p512, %s27, 1
          %s514 = smul.addr %s513, 8
          %s515 = scalar_lea.vmem %s2, %s514
        $region80: #{tpu_custom_call.1} parent=67 // pred_fallthru
          _
      $region68: #{tpu_custom_call.1} parent=5 // pred_fallthru
        _
      %p516 = scmp.le.s32.totalorder 1, %s27
      %p517 = scmp.lt.s32.totalorder %s27, 3
      %p518 = pnand %p516, %p517
      %p519 = pneg %p518
      // Predicated region
      $region81: #{tpu_custom_call.1} parent=5 // pred_check
        _
      $region82: #{tpu_custom_call.1} parent=5 // pred_check_branch
        %521 = sbr.rel (%p518) target = $region84
      $region83: #{tpu_custom_call.1} parent=5 // pred_region
        %s522 = ssub.s32 %s27, 1
        // Predicated region
        $region85: #{tpu_custom_call.1} parent=83 // pred_check
          %p523 = pneg %p168
        $region86: #{tpu_custom_call.1} parent=83 // pred_check_branch
          %525 = sbr.rel (%p523) target = $region88
        $region87: #{tpu_custom_call.1} parent=83 // pred_region
          %527 = dma.done [#allocation3], 256
        $region88: #{tpu_custom_call.1} parent=83 // pred_fallthru
          _
        // Predicated region
        $region89: #{tpu_custom_call.1} parent=83 // pred_check
          %p528 = pneg %p189
        $region90: #{tpu_custom_call.1} parent=83 // pred_check_branch
          %530 = sbr.rel (%p528) target = $region92
        $region91: #{tpu_custom_call.1} parent=83 // pred_region
          %532 = dma.done [#allocation6], 256
        $region92: #{tpu_custom_call.1} parent=83 // pred_fallthru
          _
        // Predicated region
        $region93: #{tpu_custom_call.1} parent=83 // pred_check
          %p533 = pneg %p315
        $region94: #{tpu_custom_call.1} parent=83 // pred_check_branch
          %535 = sbr.rel (%p533) target = $region96
        $region95: #{tpu_custom_call.1} parent=83 // pred_region
          %537 = dma.done [#allocation6], 256
        $region96: #{tpu_custom_call.1} parent=83 // pred_fallthru
          _
        %p538 = scmp.lt.s32.totalorder %s32, 1
        %s539 = scalar_select %p538, %s32, 1
        %s540 = smul.addr %s539, 8
        %s541 = scalar_lea.vmem %s0, %s540
        %p542 = pneg %p53
        %p543 = pneg %p50
        %p544 = scmp.lt.s32.totalorder %s32, 1
        %s545 = scalar_select %p544, %s32, 1
        %s546 = smul.addr %s545, 8
        %s547 = scalar_lea.vmem %s1, %s546
        %p548 = pneg %p79
        %p549 = pneg %p76
        %p550 = scmp.lt.s32.totalorder %s32, 1
        %s551 = scalar_select %p550, %s32, 1
        %s552 = smul.addr %s551, 8
        %s553 = scalar_lea.vmem %s2, %s552
        %p554 = pneg %p105
        %p555 = pneg %p102
        %p556 = pneg %p126
        %p557 = pneg %p123
        %p558 = pneg %p147
        %p559 = pneg %p144
        %p560 = pneg %p168
        %p561 = pneg %p165
        %p562 = pneg %p189
        %p563 = pneg %p186
        %p564 = pneg %p210
        %p565 = pneg %p207
        %p566 = pneg %p231
        %p567 = pneg %p228
        %p568 = pneg %p252
        %p569 = pneg %p249
        %p570 = pneg %p273
        %p571 = pneg %p270
        %p572 = pneg %p294
        %p573 = pneg %p291
        %p574 = pneg %p315
        %p575 = pneg %p312
        %p576 = pneg %p336
        %p577 = pneg %p333
        %p578 = pneg %p357
        %p579 = pneg %p354
        %p580 = pneg %p378
        %p581 = pneg %p375
        %p582 = pneg %p404
        %p583 = pneg %p401
        %s584 = sand.u32 %s391, 1
        %s585 = scalar_lea.sflag [#allocation4], %s584
        %s586 = sand.u32 %s391, 1
        %s587 = smul.addr %s586, 8
        %s588 = scalar_lea.vmem [#allocation8], %s587
        %p589 = scmp.lt.s32.totalorder %s32, 1
        %s590 = scalar_select %p589, %s32, 1
        %s591 = smul.addr %s590, 8
        %s592 = scalar_lea.vmem %s0, %s591
        %p593 = scmp.lt.s32.totalorder %s32, 1
        %s594 = scalar_select %p593, %s32, 1
        %s595 = smul.addr %s594, 8
        %s596 = scalar_lea.vmem %s1, %s595
        %p597 = scmp.lt.s32.totalorder %s32, 1
        %s598 = scalar_select %p597, %s32, 1
        %s599 = smul.addr %s598, 8
        %s600 = scalar_lea.vmem %s2, %s599
        %v602 = vld [vmem:[%s600] sm:$0xff]
        %v603 = vld [vmem:[%s596] sm:$0xff]
        %v604 = vld [vmem:[%s592] sm:$0xff]
        %v605 = vpack.c.bf16 %v602, %v602
        %v606 = vld [vmem:[#allocation2] sm:$0xf]
        %v607 = vld [vmem:[#allocation2 + $0x4] sm:$0xf]
        %v608 = vld [vmem:[#allocation2 + $0x8] sm:$0xf]
        %v609 = vld [vmem:[#allocation2 + $0xc] sm:$0xf]
        %v614 = vunpack.c.l.b16 %v606
        %v615 = vunpack.c.l.b16 %v607
        %v616 = vunpack.c.l.b16 %v608
        %v617 = vunpack.c.l.b16 %v609
        %v618 = vpack.c.b16 %v615, %v614
        %v619 = vpack.c.b16 %v617, %v616
        %vm622 = vcmask 261120
        %v624 = vsel %vm622, %v605, 0
        %626 = vmatpush.bf16.msra.mxu0 0
        %627 = vmatpush.bf16.msra.mxu0 0
        %628 = vmatpush.bf16.msra.mxu0 0
        %629 = vmatpush.bf16.msra.mxu0 0
        %630 = vmatpush.bf16.msra.mxu0 0
        %631 = vmatpush.bf16.msra.mxu0 0
        %632 = vmatpush.bf16.msra.mxu0 %v619
        %633 = vmatpush.bf16.msra.mxu0 %v618
        %634 = vmatmul.bf16.gmra.mxu0 %v624
        %v635 = vpop.f32.mrf.mxu0
        %v636 = vadd.f32 0.0, %v635
        %v637 = vpop.f32.mrf.mxu0
        %638 = vdwg.mxu0
        %v639 = vpack.c.bf16 %v603, %v603
        %v640 = vld [vmem:[%s4] sm:$0xf]
        %v641 = vld [vmem:[%s4 + $0x4] sm:$0xf]
        %v642 = vld [vmem:[%s4 + $0x8] sm:$0xf]
        %v643 = vld [vmem:[%s4 + $0xc] sm:$0xf]
        %v648 = vunpack.c.l.b16 %v640
        %v649 = vunpack.c.l.b16 %v641
        %v650 = vunpack.c.l.b16 %v642
        %v651 = vunpack.c.l.b16 %v643
        %v652 = vpack.c.b16 %v649, %v648
        %v653 = vpack.c.b16 %v651, %v650
        %v657 = vsel %vm622, %v639, 0
        %659 = vmatpush.bf16.msra.mxu0 0
        %660 = vmatpush.bf16.msra.mxu0 0
        %661 = vmatpush.bf16.msra.mxu0 0
        %662 = vmatpush.bf16.msra.mxu0 0
        %663 = vmatpush.bf16.msra.mxu0 0
        %664 = vmatpush.bf16.msra.mxu0 0
        %665 = vmatpush.bf16.msra.mxu0 %v653
        %666 = vmatpush.bf16.msra.mxu0 %v652
        %667 = vmatmul.bf16.gmra.mxu0 %v657
        %v668 = vpop.f32.mrf.mxu0
        %v669 = vadd.f32 0.0, %v668
        %v670 = vpop.f32.mrf.mxu0
        %671 = vdwg.mxu0
        %v672 = vpack.c.bf16 %v604, %v604
        %v673 = vld [vmem:[%s3] sm:$0xf]
        %v674 = vld [vmem:[%s3 + $0x4] sm:$0xf]
        %v675 = vld [vmem:[%s3 + $0x8] sm:$0xf]
        %v676 = vld [vmem:[%s3 + $0xc] sm:$0xf]
        %v681 = vunpack.c.l.b16 %v673
        %v682 = vunpack.c.l.b16 %v674
        %v683 = vunpack.c.l.b16 %v675
        %v684 = vunpack.c.l.b16 %v676
        %v685 = vpack.c.b16 %v682, %v681
        %v686 = vpack.c.b16 %v684, %v683
        %v690 = vsel %vm622, %v672, 0
        %692 = vmatpush.bf16.msra.mxu0 0
        %693 = vmatpush.bf16.msra.mxu0 0
        %694 = vmatpush.bf16.msra.mxu0 0
        %695 = vmatpush.bf16.msra.mxu0 0
        %696 = vmatpush.bf16.msra.mxu0 0
        %697 = vmatpush.bf16.msra.mxu0 0
        %698 = vmatpush.bf16.msra.mxu0 %v686
        %699 = vmatpush.bf16.msra.mxu0 %v685
        %700 = vmatmul.bf16.gmra.mxu0 %v690
        %v701 = vpop.f32.mrf.mxu0
        %v702 = vadd.f32 0.0, %v701
        %v703 = vpop.f32.mrf.mxu0
        %704 = vdwg.mxu0
        %706 = vrot.lane.b32.xlu0 %v636, 120
        %v707 = vpop.permute.xlu0 %706
        %709 = vrot.lane.b32.xlu0 %v636, 112
        %v710 = vpop.permute.xlu0 %709
        %712 = vrot.lane.b32.xlu0 %v636, 104
        %v713 = vpop.permute.xlu0 %712
        %v715 = vrot.slane %v710, 4
        %vm716 = vcmask 1047556
        %v717 = vsel %vm716, %v715, %v636
        %v718 = vrot.slane %v636, 4
        %v719 = vsel %vm716, %v710, %v718
        %v721 = vunpack.c.l.s4 1983009808
        %v722 = vunpack.c.0.s8 %v721
        %v723 = vperm.slane %v717, %v722
        %v725 = vunpack.c.l.s4 1983009808
        %v726 = vunpack.c.0.s8 %v725
        %v727 = vperm.slane %v719, %v726
        %v728 = vrot.slane %v713, 4
        %v729 = vsel %vm716, %v728, %v707
        %v730 = vrot.slane %v707, 4
        %v731 = vsel %vm716, %v713, %v730
        %v733 = vunpack.c.l.s4 1983009808
        %v734 = vunpack.c.0.s8 %v733
        %v735 = vperm.slane %v729, %v734
        %v737 = vunpack.c.l.s4 1983009808
        %v738 = vunpack.c.0.s8 %v737
        %v739 = vperm.slane %v731, %v738
        %v740 = vrot.slane %v735, 4
        %v741 = vsel %vm716, %v740, %v723
        %v742 = vrot.slane %v723, 4
        %v743 = vsel %vm716, %v735, %v742
        %v745 = vunpack.c.l.s4 1934713408
        %v746 = vunpack.c.0.s8 %v745
        %v747 = vperm.slane %v741, %v746
        %v749 = vunpack.c.l.s4 1934713408
        %v750 = vunpack.c.0.s8 %v749
        %v751 = vperm.slane %v743, %v750
        %v752 = vrot.slane %v739, 4
        %v753 = vsel %vm716, %v752, %v727
        %v754 = vrot.slane %v727, 4
        %v755 = vsel %vm716, %v739, %v754
        %v757 = vunpack.c.l.s4 1934713408
        %v758 = vunpack.c.0.s8 %v757
        %v759 = vperm.slane %v753, %v758
        %v761 = vunpack.c.l.s4 1934713408
        %v762 = vunpack.c.0.s8 %v761
        %v763 = vperm.slane %v755, %v762
        %v764 = vrot.slane %v747, 4
        %v765 = vsel %vm716, 0.0, %v764
        %v766 = vrot.slane %v751, 4
        %v767 = vsel %vm716, 0.0, %v766
        %v768 = vrot.slane %v759, 4
        %v769 = vsel %vm716, 0.0, %v768
        %v770 = vrot.slane %v763, 4
        %v771 = vsel %vm716, 0.0, %v770
        %v772 = vsel %vm716, %v766, %v747
        %v774 = vunpack.c.l.s4 1983009808
        %v775 = vunpack.c.0.s8 %v774
        %v776 = vperm.slane %v772, %v775
        %v777 = vrot.slane %v767, 4
        %v778 = vsel %vm716, %v777, %v765
        %v780 = vunpack.c.l.s4 1983009808
        %v781 = vunpack.c.0.s8 %v780
        %v782 = vperm.slane %v778, %v781
        %v783 = vsel %vm716, %v770, %v759
        %v785 = vunpack.c.l.s4 1983009808
        %v786 = vunpack.c.0.s8 %v785
        %v787 = vperm.slane %v783, %v786
        %v788 = vrot.slane %v771, 4
        %v789 = vsel %vm716, %v788, %v769
        %v791 = vunpack.c.l.s4 1983009808
        %v792 = vunpack.c.0.s8 %v791
        %v793 = vperm.slane %v789, %v792
        %v794 = vrot.slane %v782, 4
        %v795 = vsel %vm716, %v794, %v776
        %v796 = vrot.slane %v776, 4
        %v797 = vsel %vm716, %v782, %v796
        %v799 = vunpack.c.l.s4 1934713408
        %v800 = vunpack.c.0.s8 %v799
        %v801 = vperm.slane %v795, %v800
        %v803 = vunpack.c.l.s4 1934713408
        %v804 = vunpack.c.0.s8 %v803
        %v805 = vperm.slane %v797, %v804
        %v806 = vrot.slane %v793, 4
        %v807 = vsel %vm716, %v806, %v787
        %v808 = vrot.slane %v787, 4
        %v809 = vsel %vm716, %v793, %v808
        %v811 = vunpack.c.l.s4 1934713408
        %v812 = vunpack.c.0.s8 %v811
        %v813 = vperm.slane %v807, %v812
        %v815 = vunpack.c.l.s4 1934713408
        %v816 = vunpack.c.0.s8 %v815
        %v817 = vperm.slane %v809, %v816
        %v818 = vrot.slane %v813, 4
        %v819 = vsel %vm716, %v818, %v801
        %v820 = vrot.slane %v801, 4
        %v821 = vsel %vm716, %v813, %v820
        %v822 = vrot.slane %v817, 4
        %v823 = vsel %vm716, %v822, %v805
        %v824 = vrot.slane %v805, 4
        %v825 = vsel %vm716, %v817, %v824
        %v826 = vpack.c.bf16 %v819, %v819
        %v827 = vpack.c.bf16 %v821, %v821
        %v828 = vpack.c.bf16 %v823, %v823
        %v829 = vpack.c.bf16 %v825, %v825
        %831 = vrot.lane.b32.xlu0 %v669, 120
        %v832 = vpop.permute.xlu0 %831
        %834 = vrot.lane.b32.xlu0 %v669, 112
        %v835 = vpop.permute.xlu0 %834
        %837 = vrot.lane.b32.xlu0 %v669, 104
        %v838 = vpop.permute.xlu0 %837
        %v840 = vrot.slane %v835, 4
        %v841 = vsel %vm716, %v840, %v669
        %v842 = vrot.slane %v669, 4
        %v843 = vsel %vm716, %v835, %v842
        %v845 = vunpack.c.l.s4 1983009808
        %v846 = vunpack.c.0.s8 %v845
        %v847 = vperm.slane %v841, %v846
        %v849 = vunpack.c.l.s4 1983009808
        %v850 = vunpack.c.0.s8 %v849
        %v851 = vperm.slane %v843, %v850
        %v852 = vrot.slane %v838, 4
        %v853 = vsel %vm716, %v852, %v832
        %v854 = vrot.slane %v832, 4
        %v855 = vsel %vm716, %v838, %v854
        %v857 = vunpack.c.l.s4 1983009808
        %v858 = vunpack.c.0.s8 %v857
        %v859 = vperm.slane %v853, %v858
        %v861 = vunpack.c.l.s4 1983009808
        %v862 = vunpack.c.0.s8 %v861
        %v863 = vperm.slane %v855, %v862
        %v864 = vrot.slane %v859, 4
        %v865 = vsel %vm716, %v864, %v847
        %v866 = vrot.slane %v847, 4
        %v867 = vsel %vm716, %v859, %v866
        %v869 = vunpack.c.l.s4 1934713408
        %v870 = vunpack.c.0.s8 %v869
        %v871 = vperm.slane %v865, %v870
        %v873 = vunpack.c.l.s4 1934713408
        %v874 = vunpack.c.0.s8 %v873
        %v875 = vperm.slane %v867, %v874
        %v876 = vrot.slane %v863, 4
        %v877 = vsel %vm716, %v876, %v851
        %v878 = vrot.slane %v851, 4
        %v879 = vsel %vm716, %v863, %v878
        %v881 = vunpack.c.l.s4 1934713408
        %v882 = vunpack.c.0.s8 %v881
        %v883 = vperm.slane %v877, %v882
        %v885 = vunpack.c.l.s4 1934713408
        %v886 = vunpack.c.0.s8 %v885
        %v887 = vperm.slane %v879, %v886
        %v888 = vrot.slane %v871, 4
        %v889 = vsel %vm716, 0.0, %v888
        %v890 = vrot.slane %v875, 4
        %v891 = vsel %vm716, 0.0, %v890
        %v892 = vrot.slane %v883, 4
        %v893 = vsel %vm716, 0.0, %v892
        %v894 = vrot.slane %v887, 4
        %v895 = vsel %vm716, 0.0, %v894
        %v896 = vsel %vm716, %v890, %v871
        %v898 = vunpack.c.l.s4 1983009808
        %v899 = vunpack.c.0.s8 %v898
        %v900 = vperm.slane %v896, %v899
        %v901 = vrot.slane %v891, 4
        %v902 = vsel %vm716, %v901, %v889
        %v904 = vunpack.c.l.s4 1983009808
        %v905 = vunpack.c.0.s8 %v904
        %v906 = vperm.slane %v902, %v905
        %v907 = vsel %vm716, %v894, %v883
        %v909 = vunpack.c.l.s4 1983009808
        %v910 = vunpack.c.0.s8 %v909
        %v911 = vperm.slane %v907, %v910
        %v912 = vrot.slane %v895, 4
        %v913 = vsel %vm716, %v912, %v893
        %v915 = vunpack.c.l.s4 1983009808
        %v916 = vunpack.c.0.s8 %v915
        %v917 = vperm.slane %v913, %v916
        %v918 = vrot.slane %v906, 4
        %v919 = vsel %vm716, %v918, %v900
        %v920 = vrot.slane %v900, 4
        %v921 = vsel %vm716, %v906, %v920
        %v923 = vunpack.c.l.s4 1934713408
        %v924 = vunpack.c.0.s8 %v923
        %v925 = vperm.slane %v919, %v924
        %v927 = vunpack.c.l.s4 1934713408
        %v928 = vunpack.c.0.s8 %v927
        %v929 = vperm.slane %v921, %v928
        %v930 = vrot.slane %v917, 4
        %v931 = vsel %vm716, %v930, %v911
        %v932 = vrot.slane %v911, 4
        %v933 = vsel %vm716, %v917, %v932
        %v935 = vunpack.c.l.s4 1934713408
        %v936 = vunpack.c.0.s8 %v935
        %v937 = vperm.slane %v931, %v936
        %v939 = vunpack.c.l.s4 1934713408
        %v940 = vunpack.c.0.s8 %v939
        %v941 = vperm.slane %v933, %v940
        %v942 = vrot.slane %v937, 4
        %v943 = vsel %vm716, %v942, %v925
        %v944 = vrot.slane %v925, 4
        %v945 = vsel %vm716, %v937, %v944
        %v946 = vrot.slane %v941, 4
        %v947 = vsel %vm716, %v946, %v929
        %v948 = vrot.slane %v929, 4
        %v949 = vsel %vm716, %v941, %v948
        %v950 = vpack.c.bf16 %v943, %v943
        %v951 = vpack.c.bf16 %v945, %v945
        %v952 = vpack.c.bf16 %v947, %v947
        %v953 = vpack.c.bf16 %v949, %v949
        %955 = vrot.lane.b32.xlu0 %v702, 120
        %v956 = vpop.permute.xlu0 %955
        %958 = vrot.lane.b32.xlu0 %v702, 112
        %v959 = vpop.permute.xlu0 %958
        %961 = vrot.lane.b32.xlu0 %v702, 104
        %v962 = vpop.permute.xlu0 %961
        %v964 = vrot.slane %v959, 4
        %v965 = vsel %vm716, %v964, %v702
        %v966 = vrot.slane %v702, 4
        %v967 = vsel %vm716, %v959, %v966
        %v969 = vunpack.c.l.s4 1983009808
        %v970 = vunpack.c.0.s8 %v969
        %v971 = vperm.slane %v965, %v970
        %v973 = vunpack.c.l.s4 1983009808
        %v974 = vunpack.c.0.s8 %v973
        %v975 = vperm.slane %v967, %v974
        %v976 = vrot.slane %v962, 4
        %v977 = vsel %vm716, %v976, %v956
        %v978 = vrot.slane %v956, 4
        %v979 = vsel %vm716, %v962, %v978
        %v981 = vunpack.c.l.s4 1983009808
        %v982 = vunpack.c.0.s8 %v981
        %v983 = vperm.slane %v977, %v982
        %v985 = vunpack.c.l.s4 1983009808
        %v986 = vunpack.c.0.s8 %v985
        %v987 = vperm.slane %v979, %v986
        %v988 = vrot.slane %v983, 4
        %v989 = vsel %vm716, %v988, %v971
        %v990 = vrot.slane %v971, 4
        %v991 = vsel %vm716, %v983, %v990
        %v993 = vunpack.c.l.s4 1934713408
        %v994 = vunpack.c.0.s8 %v993
        %v995 = vperm.slane %v989, %v994
        %v997 = vunpack.c.l.s4 1934713408
        %v998 = vunpack.c.0.s8 %v997
        %v999 = vperm.slane %v991, %v998
        %v1000 = vrot.slane %v987, 4
        %v1001 = vsel %vm716, %v1000, %v975
        %v1002 = vrot.slane %v975, 4
        %v1003 = vsel %vm716, %v987, %v1002
        %v1005 = vunpack.c.l.s4 1934713408
        %v1006 = vunpack.c.0.s8 %v1005
        %v1007 = vperm.slane %v1001, %v1006
        %v1009 = vunpack.c.l.s4 1934713408
        %v1010 = vunpack.c.0.s8 %v1009
        %v1011 = vperm.slane %v1003, %v1010
        %v1012 = vrot.slane %v995, 4
        %v1013 = vsel %vm716, 0.0, %v1012
        %v1014 = vrot.slane %v999, 4
        %v1015 = vsel %vm716, 0.0, %v1014
        %v1016 = vrot.slane %v1007, 4
        %v1017 = vsel %vm716, 0.0, %v1016
        %v1018 = vrot.slane %v1011, 4
        %v1019 = vsel %vm716, 0.0, %v1018
        %v1020 = vsel %vm716, %v1014, %v995
        %v1022 = vunpack.c.l.s4 1983009808
        %v1023 = vunpack.c.0.s8 %v1022
        %v1024 = vperm.slane %v1020, %v1023
        %v1025 = vrot.slane %v1015, 4
        %v1026 = vsel %vm716, %v1025, %v1013
        %v1028 = vunpack.c.l.s4 1983009808
        %v1029 = vunpack.c.0.s8 %v1028
        %v1030 = vperm.slane %v1026, %v1029
        %v1031 = vsel %vm716, %v1018, %v1007
        %v1033 = vunpack.c.l.s4 1983009808
        %v1034 = vunpack.c.0.s8 %v1033
        %v1035 = vperm.slane %v1031, %v1034
        %v1036 = vrot.slane %v1019, 4
        %v1037 = vsel %vm716, %v1036, %v1017
        %v1039 = vunpack.c.l.s4 1983009808
        %v1040 = vunpack.c.0.s8 %v1039
        %v1041 = vperm.slane %v1037, %v1040
        %v1042 = vrot.slane %v1030, 4
        %v1043 = vsel %vm716, %v1042, %v1024
        %v1044 = vrot.slane %v1024, 4
        %v1045 = vsel %vm716, %v1030, %v1044
        %v1047 = vunpack.c.l.s4 1934713408
        %v1048 = vunpack.c.0.s8 %v1047
        %v1049 = vperm.slane %v1043, %v1048
        %v1051 = vunpack.c.l.s4 1934713408
        %v1052 = vunpack.c.0.s8 %v1051
        %v1053 = vperm.slane %v1045, %v1052
        %v1054 = vrot.slane %v1041, 4
        %v1055 = vsel %vm716, %v1054, %v1035
        %v1056 = vrot.slane %v1035, 4
        %v1057 = vsel %vm716, %v1041, %v1056
        %v1059 = vunpack.c.l.s4 1934713408
        %v1060 = vunpack.c.0.s8 %v1059
        %v1061 = vperm.slane %v1055, %v1060
        %v1063 = vunpack.c.l.s4 1934713408
        %v1064 = vunpack.c.0.s8 %v1063
        %v1065 = vperm.slane %v1057, %v1064
        %v1066 = vrot.slane %v1061, 4
        %v1067 = vsel %vm716, %v1066, %v1049
        %v1068 = vrot.slane %v1049, 4
        %v1069 = vsel %vm716, %v1061, %v1068
        %v1070 = vrot.slane %v1065, 4
        %v1071 = vsel %vm716, %v1070, %v1053
        %v1072 = vrot.slane %v1053, 4
        %v1073 = vsel %vm716, %v1065, %v1072
        %v1074 = vpack.c.bf16 %v1067, %v1067
        %v1075 = vpack.c.bf16 %v1069, %v1069
        %v1076 = vpack.c.bf16 %v1071, %v1071
        %v1077 = vpack.c.bf16 %v1073, %v1073
        %vm1078 = vcmask 64512
        %v1080 = vsel %vm1078, %v826, 0
        %v1083 = vsel %vm1078, %v950, 0
        %1085 = vmatpush.bf16.xpose.msra.mxu0 0
        %1086 = vmatpush.bf16.xpose.msra.mxu0 0
        %1087 = vmatpush.bf16.xpose.msra.mxu0 0
        %1088 = vmatpush.bf16.xpose.msra.mxu0 0
        %1089 = vmatpush.bf16.xpose.msra.mxu0 0
        %1090 = vmatpush.bf16.xpose.msra.mxu0 0
        %1091 = vmatpush.bf16.xpose.msra.mxu0 0
        %1092 = vmatpush.bf16.xpose.msra.mxu0 %v1083
        %1093 = vmatmul.bf16.gmra.mxu0 %v1080
        %v1094 = vpop.f32.mrf.mxu0
        %v1095 = vadd.f32 0.0, %v1094
        %v1096 = vpop.f32.mrf.mxu0
        %1097 = vdwg.mxu0
        %v1099 = vsel %vm1078, %v827, 0
        %v1102 = vsel %vm1078, %v951, 0
        %1104 = vmatpush.bf16.xpose.msra.mxu0 0
        %1105 = vmatpush.bf16.xpose.msra.mxu0 0
        %1106 = vmatpush.bf16.xpose.msra.mxu0 0
        %1107 = vmatpush.bf16.xpose.msra.mxu0 0
        %1108 = vmatpush.bf16.xpose.msra.mxu0 0
        %1109 = vmatpush.bf16.xpose.msra.mxu0 0
        %1110 = vmatpush.bf16.xpose.msra.mxu0 0
        %1111 = vmatpush.bf16.xpose.msra.mxu0 %v1102
        %1112 = vmatmul.bf16.gmra.mxu0 %v1099
        %v1113 = vpop.f32.mrf.mxu0
        %v1114 = vadd.f32 0.0, %v1113
        %v1115 = vpop.f32.mrf.mxu0
        %1116 = vdwg.mxu0
        %v1118 = vsel %vm1078, %v828, 0
        %v1121 = vsel %vm1078, %v952, 0
        %1123 = vmatpush.bf16.xpose.msra.mxu0 0
        %1124 = vmatpush.bf16.xpose.msra.mxu0 0
        %1125 = vmatpush.bf16.xpose.msra.mxu0 0
        %1126 = vmatpush.bf16.xpose.msra.mxu0 0
        %1127 = vmatpush.bf16.xpose.msra.mxu0 0
        %1128 = vmatpush.bf16.xpose.msra.mxu0 0
        %1129 = vmatpush.bf16.xpose.msra.mxu0 0
        %1130 = vmatpush.bf16.xpose.msra.mxu0 %v1121
        %1131 = vmatmul.bf16.gmra.mxu0 %v1118
        %v1132 = vpop.f32.mrf.mxu0
        %v1133 = vadd.f32 0.0, %v1132
        %v1134 = vpop.f32.mrf.mxu0
        %1135 = vdwg.mxu0
        %v1137 = vsel %vm1078, %v829, 0
        %v1140 = vsel %vm1078, %v953, 0
        %1142 = vmatpush.bf16.xpose.msra.mxu0 0
        %1143 = vmatpush.bf16.xpose.msra.mxu0 0
        %1144 = vmatpush.bf16.xpose.msra.mxu0 0
        %1145 = vmatpush.bf16.xpose.msra.mxu0 0
        %1146 = vmatpush.bf16.xpose.msra.mxu0 0
        %1147 = vmatpush.bf16.xpose.msra.mxu0 0
        %1148 = vmatpush.bf16.xpose.msra.mxu0 0
        %1149 = vmatpush.bf16.xpose.msra.mxu0 %v1140
        %1150 = vmatmul.bf16.gmra.mxu0 %v1137
        %v1151 = vpop.f32.mrf.mxu0
        %v1152 = vadd.f32 0.0, %v1151
        %v1153 = vpop.f32.mrf.mxu0
        %1154 = vdwg.mxu0
        %v1155 = vmul.f32 %v1095, 0.17677669
        %v1156 = vmul.f32 %v1114, 0.17677669
        %v1157 = vmul.f32 %v1133, 0.17677669
        %v1158 = vmul.f32 %v1152, 0.17677669
        %v1159 = vsel %vm1078, %v1155, -inf
        %1160 = vmax.xlane.f32.xlu0 %v1159
        %v1161 = vpop.xlane.xlu0 %1160
        %v1162 = vsel %vm1078, %v1156, -inf
        %1163 = vmax.xlane.f32.xlu0 %v1162
        %v1164 = vpop.xlane.xlu0 %1163
        %v1165 = vsel %vm1078, %v1157, -inf
        %1166 = vmax.xlane.f32.xlu0 %v1165
        %v1167 = vpop.xlane.xlu0 %1166
        %v1168 = vsel %vm1078, %v1158, -inf
        %1169 = vmax.xlane.f32.xlu0 %v1168
        %v1170 = vpop.xlane.xlu0 %1169
        %v1171 = vsub.f32 %v1155, %v1161
        %v1172 = vsub.f32 %v1156, %v1164
        %v1173 = vsub.f32 %v1157, %v1167
        %v1174 = vsub.f32 %v1158, %v1170
        %v1175 = vmul.f32 %v1171, 1.442695
        %v1176 = vpow.pop %v1175
        %v1177 = vmul.f32 %v1172, 1.442695
        %v1178 = vpow.pop %v1177
        %v1179 = vmul.f32 %v1173, 1.442695
        %v1180 = vpow.pop %v1179
        %v1181 = vmul.f32 %v1174, 1.442695
        %v1182 = vpow.pop %v1181
        %v1183 = vsel %vm1078, %v1176, 0.0
        %1184 = vadd.xlane.f32.xlu0 %v1183
        %v1185 = vpop.xlane.xlu0 %1184
        %v1186 = vsel %vm1078, %v1178, 0.0
        %1187 = vadd.xlane.f32.xlu0 %v1186
        %v1188 = vpop.xlane.xlu0 %1187
        %v1189 = vsel %vm1078, %v1180, 0.0
        %1190 = vadd.xlane.f32.xlu0 %v1189
        %v1191 = vpop.xlane.xlu0 %1190
        %v1192 = vsel %vm1078, %v1182, 0.0
        %1193 = vadd.xlane.f32.xlu0 %v1192
        %v1194 = vpop.xlane.xlu0 %1193
        %v1195 = vrcp.pop %v1185
        %v1196 = vrcp.pop %v1188
        %v1197 = vrcp.pop %v1191
        %v1198 = vrcp.pop %v1194
        %v1199 = vmul.f32 %v1176, %v1195
        %v1200 = vmul.f32 %v1178, %v1196
        %v1201 = vmul.f32 %v1180, %v1197
        %v1202 = vmul.f32 %v1182, %v1198
        %v1203 = vpack.c.bf16 %v1199, %v1199
        %v1204 = vpack.c.bf16 %v1200, %v1200
        %v1205 = vpack.c.bf16 %v1201, %v1201
        %v1206 = vpack.c.bf16 %v1202, %v1202
        %v1208 = vsel %vm1078, %v1203, 0
        %vm1210 = vcmask 1043456
        %v1212 = vsel %vm1210, %v1074, 0
        %1214 = vmatpush.bf16.msra.mxu0 0
        %1215 = vmatpush.bf16.msra.mxu0 0
        %1216 = vmatpush.bf16.msra.mxu0 0
        %1217 = vmatpush.bf16.msra.mxu0 0
        %1218 = vmatpush.bf16.msra.mxu0 0
        %1219 = vmatpush.bf16.msra.mxu0 0
        %1220 = vmatpush.bf16.msra.mxu0 0
        %1221 = vmatpush.bf16.msra.mxu0 %v1212
        %1222 = vmatmul.bf16.gmra.mxu0 %v1208
        %v1223 = vpop.f32.mrf.mxu0
        %v1224 = vadd.f32 0.0, %v1223
        %v1225 = vpop.f32.mrf.mxu0
        %1226 = vdwg.mxu0
        %v1228 = vsel %vm1078, %v1204, 0
        %v1231 = vsel %vm1210, %v1075, 0
        %1233 = vmatpush.bf16.msra.mxu0 0
        %1234 = vmatpush.bf16.msra.mxu0 0
        %1235 = vmatpush.bf16.msra.mxu0 0
        %1236 = vmatpush.bf16.msra.mxu0 0
        %1237 = vmatpush.bf16.msra.mxu0 0
        %1238 = vmatpush.bf16.msra.mxu0 0
        %1239 = vmatpush.bf16.msra.mxu0 0
        %1240 = vmatpush.bf16.msra.mxu0 %v1231
        %1241 = vmatmul.bf16.gmra.mxu0 %v1228
        %v1242 = vpop.f32.mrf.mxu0
        %v1243 = vadd.f32 0.0, %v1242
        %v1244 = vpop.f32.mrf.mxu0
        %1245 = vdwg.mxu0
        %v1247 = vsel %vm1078, %v1205, 0
        %v1250 = vsel %vm1210, %v1076, 0
        %1252 = vmatpush.bf16.msra.mxu0 0
        %1253 = vmatpush.bf16.msra.mxu0 0
        %1254 = vmatpush.bf16.msra.mxu0 0
        %1255 = vmatpush.bf16.msra.mxu0 0
        %1256 = vmatpush.bf16.msra.mxu0 0
        %1257 = vmatpush.bf16.msra.mxu0 0
        %1258 = vmatpush.bf16.msra.mxu0 0
        %1259 = vmatpush.bf16.msra.mxu0 %v1250
        %1260 = vmatmul.bf16.gmra.mxu0 %v1247
        %v1261 = vpop.f32.mrf.mxu0
        %v1262 = vadd.f32 0.0, %v1261
        %v1263 = vpop.f32.mrf.mxu0
        %1264 = vdwg.mxu0
        %v1266 = vsel %vm1078, %v1206, 0
        %v1269 = vsel %vm1210, %v1077, 0
        %1271 = vmatpush.bf16.msra.mxu0 0
        %1272 = vmatpush.bf16.msra.mxu0 0
        %1273 = vmatpush.bf16.msra.mxu0 0
        %1274 = vmatpush.bf16.msra.mxu0 0
        %1275 = vmatpush.bf16.msra.mxu0 0
        %1276 = vmatpush.bf16.msra.mxu0 0
        %1277 = vmatpush.bf16.msra.mxu0 0
        %1278 = vmatpush.bf16.msra.mxu0 %v1269
        %1279 = vmatmul.bf16.gmra.mxu0 %v1266
        %v1280 = vpop.f32.mrf.mxu0
        %v1281 = vadd.f32 0.0, %v1280
        %v1282 = vpop.f32.mrf.mxu0
        %1283 = vdwg.mxu0
        %v1284 = vrot.slane %v1262, 4
        %v1285 = vsel %vm716, %v1284, %v1224
        %v1286 = vrot.slane %v1224, 4
        %v1287 = vsel %vm716, %v1262, %v1286
        %v1289 = vunpack.c.l.s4 1983009808
        %v1290 = vunpack.c.0.s8 %v1289
        %v1291 = vperm.slane %v1285, %v1290
        %v1293 = vunpack.c.l.s4 1983009808
        %v1294 = vunpack.c.0.s8 %v1293
        %v1295 = vperm.slane %v1287, %v1294
        %v1296 = vrot.slane %v1281, 4
        %v1297 = vsel %vm716, %v1296, %v1243
        %v1298 = vrot.slane %v1243, 4
        %v1299 = vsel %vm716, %v1281, %v1298
        %v1301 = vunpack.c.l.s4 1983009808
        %v1302 = vunpack.c.0.s8 %v1301
        %v1303 = vperm.slane %v1297, %v1302
        %v1305 = vunpack.c.l.s4 1983009808
        %v1306 = vunpack.c.0.s8 %v1305
        %v1307 = vperm.slane %v1299, %v1306
        %v1308 = vrot.slane %v1303, 4
        %v1309 = vsel %vm716, %v1308, %v1291
        %v1310 = vrot.slane %v1291, 4
        %v1311 = vsel %vm716, %v1303, %v1310
        %v1313 = vunpack.c.l.s4 1934713408
        %v1314 = vunpack.c.0.s8 %v1313
        %v1315 = vperm.slane %v1309, %v1314
        %v1317 = vunpack.c.l.s4 1934713408
        %v1318 = vunpack.c.0.s8 %v1317
        %v1319 = vperm.slane %v1311, %v1318
        %v1320 = vrot.slane %v1307, 4
        %v1321 = vsel %vm716, %v1320, %v1295
        %v1322 = vrot.slane %v1295, 4
        %v1323 = vsel %vm716, %v1307, %v1322
        %v1325 = vunpack.c.l.s4 1934713408
        %v1326 = vunpack.c.0.s8 %v1325
        %v1327 = vperm.slane %v1321, %v1326
        %v1329 = vunpack.c.l.s4 1934713408
        %v1330 = vunpack.c.0.s8 %v1329
        %v1331 = vperm.slane %v1323, %v1330
        %v1332 = vrot.slane %v1315, 4
        %v1333 = vsel %vm716, 0.0, %v1332
        %v1334 = vrot.slane %v1319, 4
        %v1335 = vsel %vm716, 0.0, %v1334
        %v1336 = vrot.slane %v1327, 4
        %v1337 = vsel %vm716, 0.0, %v1336
        %v1338 = vrot.slane %v1331, 4
        %v1339 = vsel %vm716, 0.0, %v1338
        %v1340 = vsel %vm716, %v1334, %v1315
        %v1342 = vunpack.c.l.s4 1983009808
        %v1343 = vunpack.c.0.s8 %v1342
        %v1344 = vperm.slane %v1340, %v1343
        %v1345 = vrot.slane %v1335, 4
        %v1346 = vsel %vm716, %v1345, %v1333
        %v1348 = vunpack.c.l.s4 1983009808
        %v1349 = vunpack.c.0.s8 %v1348
        %v1350 = vperm.slane %v1346, %v1349
        %v1351 = vsel %vm716, %v1338, %v1327
        %v1353 = vunpack.c.l.s4 1983009808
        %v1354 = vunpack.c.0.s8 %v1353
        %v1355 = vperm.slane %v1351, %v1354
        %v1356 = vrot.slane %v1339, 4
        %v1357 = vsel %vm716, %v1356, %v1337
        %v1359 = vunpack.c.l.s4 1983009808
        %v1360 = vunpack.c.0.s8 %v1359
        %v1361 = vperm.slane %v1357, %v1360
        %v1362 = vrot.slane %v1350, 4
        %v1363 = vsel %vm716, %v1362, %v1344
        %v1364 = vrot.slane %v1344, 4
        %v1365 = vsel %vm716, %v1350, %v1364
        %v1367 = vunpack.c.l.s4 1934713408
        %v1368 = vunpack.c.0.s8 %v1367
        %v1369 = vperm.slane %v1363, %v1368
        %v1371 = vunpack.c.l.s4 1934713408
        %v1372 = vunpack.c.0.s8 %v1371
        %v1373 = vperm.slane %v1365, %v1372
        %v1374 = vrot.slane %v1361, 4
        %v1375 = vsel %vm716, %v1374, %v1355
        %v1376 = vrot.slane %v1355, 4
        %v1377 = vsel %vm716, %v1361, %v1376
        %v1379 = vunpack.c.l.s4 1934713408
        %v1380 = vunpack.c.0.s8 %v1379
        %v1381 = vperm.slane %v1375, %v1380
        %v1383 = vunpack.c.l.s4 1934713408
        %v1384 = vunpack.c.0.s8 %v1383
        %v1385 = vperm.slane %v1377, %v1384
        %v1386 = vrot.slane %v1381, 4
        %v1387 = vsel %vm716, %v1386, %v1369
        %v1388 = vrot.slane %v1369, 4
        %v1389 = vsel %vm716, %v1381, %v1388
        %v1390 = vrot.slane %v1385, 4
        %v1391 = vsel %vm716, %v1390, %v1373
        %v1392 = vrot.slane %v1373, 4
        %v1393 = vsel %vm716, %v1385, %v1392
        %1395 = vrot.lane.b32.xlu0 %v1389, 8
        %v1396 = vpop.permute.xlu0 %1395
        %1399 = vrot.lane.b32.xlu0 %v1391, 16
        %v1400 = vpop.permute.xlu0 %1399
        %1403 = vrot.lane.b32.xlu0 %v1393, 24
        %v1404 = vpop.permute.xlu0 %1403
        %v1406 = vsel %vm1078, %v1387, %v1396
        %vm1407 = vcmask 130048
        %v1408 = vsel %vm1407, %v1406, %v1400
        %vm1409 = vcmask 195584
        %v1410 = vsel %vm1409, %v1408, %v1404
        %v1411 = vpack.c.bf16 %v1410, %v1410
        %v1412 = vld [vmem:[#allocation5] sm:$0xf]
        %v1413 = vld [vmem:[#allocation5 + $0x4] sm:$0xf]
        %v1414 = vld [vmem:[#allocation5 + $0x8] sm:$0xf]
        %v1415 = vld [vmem:[#allocation5 + $0xc] sm:$0xf]
        %v1416 = vld [vmem:[%s7] sm:$0x1]
        %v1418 = vperm.slane %v1416, 0
        %v1424 = vunpack.c.l.b16 %v1412
        %v1425 = vunpack.c.l.b16 %v1413
        %v1426 = vunpack.c.l.b16 %v1414
        %v1427 = vunpack.c.l.b16 %v1415
        %v1428 = vpack.c.b16 %v1425, %v1424
        %v1429 = vpack.c.b16 %v1427, %v1426
        %v1433 = vsel %vm622, %v1411, 0
        %1435 = vmatpush.bf16.msra.mxu0 0
        %1436 = vmatpush.bf16.msra.mxu0 0
        %1437 = vmatpush.bf16.msra.mxu0 0
        %1438 = vmatpush.bf16.msra.mxu0 0
        %1439 = vmatpush.bf16.msra.mxu0 0
        %1440 = vmatpush.bf16.msra.mxu0 0
        %1441 = vmatpush.bf16.msra.mxu0 %v1429
        %1442 = vmatpush.bf16.msra.mxu0 %v1428
        %1443 = vmatmul.bf16.gmra.mxu0 %v1433
        %v1444 = vpop.f32.mrf.mxu0
        %v1445 = vadd.f32 %v1418, %v1444
        %v1446 = vpop.f32.mrf.mxu0
        %1447 = vdwg.mxu0
        %v1448 = vadd.f32 %v1445, %v602
        %v1449 = vld [vmem:[%s8] sm:$0x1]
        %v1450 = vld [vmem:[%s9] sm:$0x1]
        %v1451 = vsel %vm622, %v1448, 0.0
        %1452 = vadd.xlane.f32.xlu0 %v1451
        %v1453 = vpop.xlane.xlu0 %1452
        %v1454 = vrcp.pop 32.0
        %v1455 = vmul.f32 32.0, %v1454
        %v1456 = vsub.f32 1.0, %v1455
        %v1457 = vmul.f32 %v1454, %v1456
        %v1458 = vadd.f32 %v1454, %v1457
        %vm1459 = vweird.f32 %v1454
        %v1460 = vsel %vm1459, %v1454, %v1458
        %v1461 = vmul.f32 %v1453, %v1460
        %v1462 = vsub.f32 %v1448, %v1461
        %v1463 = vmul.f32 %v1462, %v1462
        %v1464 = vsel %vm622, %v1463, 0.0
        %1465 = vadd.xlane.f32.xlu0 %v1464
        %v1466 = vpop.xlane.xlu0 %1465
        %v1467 = vmul.f32 %v1466, %v1460
        %v1468 = vadd.f32 %v1467, 1e-05
        %v1469 = vrsqrt.pop %v1468
        %v1470 = vmul.f32 %v1469, %v1468
        %v1471 = vmul.f32 %v1470, %v1469
        %v1472 = vmul.f32 0.5, %v1471
        %v1473 = vsub.f32 1.5, %v1472
        %v1474 = vmul.f32 %v1469, %v1473
        %vm1475 = vweird.f32 %v1468
        %vm1476 = vweird.f32 %v1469
        %vm1477 = vmor %vm1475, %vm1476
        %v1478 = vsel %vm1477, %v1469, %v1474
        %v1479 = vmul.f32 %v1462, %v1478
        %v1481 = vperm.slane %v1449, 0
        %v1483 = vmul.f32 %v1479, %v1481
        %v1485 = vperm.slane %v1450, 0
        %v1487 = vadd.f32 %v1483, %v1485
        %v1488 = vpack.c.bf16 %v1487, %v1487
        %v1489 = vld [vmem:[#allocation7] sm:$0xf]
        %v1490 = vld [vmem:[#allocation7 + $0x4] sm:$0xf]
        %v1491 = vld [vmem:[#allocation7 + $0x8] sm:$0xf]
        %v1492 = vld [vmem:[#allocation7 + $0xc] sm:$0xf]
        %v1493 = vld [vmem:[%s13] sm:$0x1]
        %v1495 = vperm.slane %v1493, 0
        %v1501 = vunpack.c.l.b16 %v1489
        %v1502 = vunpack.c.l.b16 %v1490
        %v1503 = vunpack.c.l.b16 %v1491
        %v1504 = vunpack.c.l.b16 %v1492
        %v1505 = vpack.c.b16 %v1502, %v1501
        %v1506 = vpack.c.b16 %v1504, %v1503
        %v1510 = vsel %vm622, %v1488, 0
        %1512 = vmatpush.bf16.msra.mxu0 0
        %1513 = vmatpush.bf16.msra.mxu0 0
        %1514 = vmatpush.bf16.msra.mxu0 0
        %1515 = vmatpush.bf16.msra.mxu0 0
        %1516 = vmatpush.bf16.msra.mxu0 0
        %1517 = vmatpush.bf16.msra.mxu0 0
        %1518 = vmatpush.bf16.msra.mxu0 %v1506
        %1519 = vmatpush.bf16.msra.mxu0 %v1505
        %1520 = vmatmul.bf16.gmra.mxu0 %v1510
        %v1521 = vpop.f32.mrf.mxu0
        %v1522 = vadd.f32 %v1495, %v1521
        %v1523 = vpop.f32.mrf.mxu0
        %1524 = vdwg.mxu0
        %v1525 = vtanh.pop %v1522
        %v1526 = vpack.c.bf16 %v1525, %v1525
        %v1527 = vld [vmem:[%s14] sm:$0xf]
        %v1528 = vld [vmem:[%s14 + $0x4] sm:$0xf]
        %v1529 = vld [vmem:[%s14 + $0x8] sm:$0xf]
        %v1530 = vld [vmem:[%s14 + $0xc] sm:$0xf]
        %v1531 = vld [vmem:[%s14 + $0x10] sm:$0xf]
        %v1532 = vld [vmem:[%s14 + $0x14] sm:$0xf]
        %v1533 = vld [vmem:[%s14 + $0x18] sm:$0xf]
        %v1534 = vld [vmem:[%s14 + $0x1c] sm:$0xf]
        %v1535 = vld [vmem:[%s14 + $0x20] sm:$0xf]
        %v1536 = vld [vmem:[%s14 + $0x24] sm:$0xf]
        %v1537 = vld [vmem:[%s14 + $0x28] sm:$0xf]
        %v1538 = vld [vmem:[%s14 + $0x2c] sm:$0xf]
        %v1539 = vld [vmem:[%s14 + $0x30] sm:$0xf]
        %v1540 = vld [vmem:[%s14 + $0x34] sm:$0xf]
        %v1541 = vld [vmem:[%s14 + $0x38] sm:$0xf]
        %v1542 = vld [vmem:[%s14 + $0x3c] sm:$0xf]
        %v1543 = vld [vmem:[%s15] sm:$0x1]
        %v1545 = vperm.slane %v1543, 0
        %v1563 = vunpack.c.l.b16 %v1527
        %v1564 = vunpack.c.l.b16 %v1528
        %v1565 = vunpack.c.l.b16 %v1529
        %v1566 = vunpack.c.l.b16 %v1530
        %v1567 = vunpack.c.l.b16 %v1531
        %v1568 = vunpack.c.l.b16 %v1532
        %v1569 = vunpack.c.l.b16 %v1533
        %v1570 = vunpack.c.l.b16 %v1534
        %v1571 = vunpack.c.l.b16 %v1535
        %v1572 = vunpack.c.l.b16 %v1536
        %v1573 = vunpack.c.l.b16 %v1537
        %v1574 = vunpack.c.l.b16 %v1538
        %v1575 = vunpack.c.l.b16 %v1539
        %v1576 = vunpack.c.l.b16 %v1540
        %v1577 = vunpack.c.l.b16 %v1541
        %v1578 = vunpack.c.l.b16 %v1542
        %v1579 = vpack.c.b16 %v1564, %v1563
        %v1580 = vpack.c.b16 %v1566, %v1565
        %v1581 = vpack.c.b16 %v1568, %v1567
        %v1582 = vpack.c.b16 %v1570, %v1569
        %v1583 = vpack.c.b16 %v1572, %v1571
        %v1584 = vpack.c.b16 %v1574, %v1573
        %v1585 = vpack.c.b16 %v1576, %v1575
        %v1586 = vpack.c.b16 %v1578, %v1577
        %1595 = vmatpush.bf16.msra.mxu0 %v1586
        %1596 = vmatpush.bf16.msra.mxu0 %v1585
        %1597 = vmatpush.bf16.msra.mxu0 %v1584
        %1598 = vmatpush.bf16.msra.mxu0 %v1583
        %1599 = vmatpush.bf16.msra.mxu0 %v1582
        %1600 = vmatpush.bf16.msra.mxu0 %v1581
        %1601 = vmatpush.bf16.msra.mxu0 %v1580
        %1602 = vmatpush.bf16.msra.mxu0 %v1579
        %1603 = vmatmul.bf16.gmra.mxu0 %v1526
        %v1604 = vpop.f32.mrf.mxu0
        %v1605 = vadd.f32 %v1545, %v1604
        %v1606 = vpop.f32.mrf.mxu0
        %1607 = vdwg.mxu0
        %v1608 = vadd.f32 %v1605, %v1487
        %v1609 = vld [vmem:[%s10] sm:$0x1]
        %v1610 = vld [vmem:[%s11] sm:$0x1]
        %v1611 = vsel %vm622, %v1608, 0.0
        %1612 = vadd.xlane.f32.xlu0 %v1611
        %v1613 = vpop.xlane.xlu0 %1612
        %v1614 = vmul.f32 %v1613, %v1460
        %v1615 = vsub.f32 %v1608, %v1614
        %v1616 = vmul.f32 %v1615, %v1615
        %v1617 = vsel %vm622, %v1616, 0.0
        %1618 = vadd.xlane.f32.xlu0 %v1617
        %v1619 = vpop.xlane.xlu0 %1618
        %v1620 = vmul.f32 %v1619, %v1460
        %v1621 = vadd.f32 %v1620, 1e-05
        %v1622 = vrsqrt.pop %v1621
        %v1623 = vmul.f32 %v1622, %v1621
        %v1624 = vmul.f32 %v1623, %v1622
        %v1625 = vmul.f32 0.5, %v1624
        %v1626 = vsub.f32 1.5, %v1625
        %v1627 = vmul.f32 %v1622, %v1626
        %vm1628 = vweird.f32 %v1621
        %vm1629 = vweird.f32 %v1622
        %vm1630 = vmor %vm1628, %vm1629
        %v1631 = vsel %vm1630, %v1622, %v1627
        %v1632 = vmul.f32 %v1615, %v1631
        %v1634 = vperm.slane %v1609, 0
        %v1636 = vmul.f32 %v1632, %v1634
        %v1638 = vperm.slane %v1610, 0
        %v1640 = vadd.f32 %v1636, %v1638
        %1641 = vst.msk [vmem:[%s588] sm:$0xff] %vm622, %v1640
        %s1642 = sand.u32 %s391, 1
        %s1643 = scalar_lea.sflag [#allocation4], %s1642
        %s1644 = sand.u32 %s391, 1
        %s1645 = smul.addr %s1644, 8
        %s1646 = scalar_lea.vmem [#allocation8], %s1645
        // Predicated region
        $region97: #{tpu_custom_call.1} parent=83 // pred_check
          %p1647 = pneg %p401
        $region98: #{tpu_custom_call.1} parent=83 // pred_check_branch
          %1649 = sbr.rel (%p1647) target = $region100
        $region99: #{tpu_custom_call.1} parent=83 // pred_region
          %1651 = vsyncadd %s1643, 0
          %s1652 = smul.addr %s32, 8
          %s1653 = scalar_lea.hbm %s16, %s1652
          %s1655 = sshll.u32 %s1646, 4
          %s1656 = int_to_ptr.vmem [resolvable:$true] %s1655
          %s1657 = sshll.u32 %s1653, 4
          %s1658 = int_to_ptr.hbm [resolvable:$true] %s1657
          %1660 = dma.vmem_to_hbm [thread:$0]  %s1656, 128, %s1658, %s1643
        $region100: #{tpu_custom_call.1} parent=83 // pred_fallthru
          _
      $region84: #{tpu_custom_call.1} parent=5 // pred_fallthru
        _
      %p1661 = scmp.le.s32.totalorder 2, %s27
      // Predicated region
      $region101: #{tpu_custom_call.1} parent=5 // pred_check
        %p1662 = pneg %p1661
      $region102: #{tpu_custom_call.1} parent=5 // pred_check_branch
        %1664 = sbr.rel (%p1662) target = $region104
      $region103: #{tpu_custom_call.1} parent=5 // pred_region
        %s1665 = ssub.s32 %s27, 2
        // Predicated region
        $region105: #{tpu_custom_call.1} parent=103 // pred_check
          %p1666 = pneg %p407
        $region106: #{tpu_custom_call.1} parent=103 // pred_check_branch
          %1668 = sbr.rel (%p1666) target = $region108
        $region107: #{tpu_custom_call.1} parent=103 // pred_region
          %s1669 = sand.u32 %s392, 1
          %s1670 = scalar_lea.sflag [#allocation4], %s1669
          %s1671 = sand.u32 %s392, 1
          %s1672 = smul.addr %s1671, 8
          %s1673 = scalar_lea.vmem [#allocation8], %s1672
          %1675 = dma.done %s1670, 128
        $region108: #{tpu_custom_call.1} parent=103 // pred_fallthru
          _
      $region104: #{tpu_custom_call.1} parent=5 // pred_fallthru
        _
    $region6: #{tpu_custom_call.1} parent=1 // loop_footer
      %s31 = sadd.s32 1, %s27
    $region7: #{tpu_custom_call.1} parent=1 // loop_footer_branch
      %26 = sbr.rel target = $region3
    $region8: #{tpu_custom_call.1} parent=1 // loop_exit
      _
    %1676 = vsyncpa [#allocation3], 1
    %s1677 = scalar_lea.sflag [#allocation3], 1
    %1678 = vsyncpa %s1677, 1
    %1679 = vsyncpa [#allocation6], 1
    %1680 = vsyncpa [#allocation4], 1
    %s1681 = scalar_lea.sflag [#allocation4], 1
    %1682 = vsyncpa %s1681, 1

</llo_original>
